<compile_context>
chip_gen: v7x
topology: tpu7x:2x2x1
jax: 0.10.0
libtpu: 0.0.40
codegen_flags: <defaults>
</compile_context>

<pallas_src>
import numpy as np
import jax
import jax.numpy as jnp
from jax import lax
from jax.experimental import pallas as pl
from jax.experimental.pallas import tpu as pltpu


# ---------------------------------------------------------------------------
# Kernel
# ---------------------------------------------------------------------------
def critic_state_kernel(xu_ref,
                        w1_ref, b1_ref,
                        w2_ref, b2_ref,
                        w3_ref, b3_ref,
                        w4t_ref, b4_ref,
                        out_ref):
    # Layer 1: cat([x, u]) was folded wrapper-side into a single bf16 tile.
    h = (jnp.dot(xu_ref[...], w1_ref[...], preferred_element_type=jnp.float32)
         + b1_ref[...])
    h = jnp.maximum(h, 0.0)
    # Layer 2
    h = (jnp.dot(h.astype(jnp.bfloat16), w2_ref[...],
                 preferred_element_type=jnp.float32) + b2_ref[...])
    h = jnp.maximum(h, 0.0)
    # Layer 3
    h = (jnp.dot(h.astype(jnp.bfloat16), w3_ref[...],
                 preferred_element_type=jnp.float32) + b3_ref[...])
    h = jnp.maximum(h, 0.0)
    # Layer 4, transposed: (1, H3p) x (tb, H3p)^T -> (1, tb).
    # The tb axis (multiple of 128) is the lane axis, so the f32 store is a
    # single unmasked lane-dense row instead of a 128x-padded block.
    q = lax.dot_general(w4t_ref[...], h.astype(jnp.bfloat16),
                        dimension_numbers=(((1,), (1,)), ((), ())),
                        preferred_element_type=jnp.float32)
    out_ref[...] = q + b4_ref[...]


# ---------------------------------------------------------------------------
# Wrapper
# ---------------------------------------------------------------------------
def _round_up(x, m):
    return ((x + m - 1) // m) * m


def _cdiv(a, b):
    return (a + b - 1) // b


def _choose_batch_tile(B, tile_b):
    """Pick a lane-aligned (multiple of 128) batch tile and padded batch size.

    Keeps the grid >= 2 steps when the batch allows it (v7x has 2 TensorCores;
    extra steps are harmless on single-TC v5e/v6e)."""
    tb_cap = min(_round_up(tile_b, 128), _round_up(B, 128))
    n_steps = _cdiv(_round_up(B, 128), tb_cap)
    if B > 128:
        n_steps = max(n_steps, 2)
    tb = _round_up(_cdiv(B, n_steps), 128)
    return tb, tb * n_steps


def critic_state_forward(x, u, params, tile_b=1024):
    """x: (B, state_dim), u: (B, action_dim) -> (B, 1) float32."""
    (w1, b1, w2, b2, w3, b3, w4t, b4) = params
    B = x.shape[0]

    # Fold the concat into a single bf16 input tile (one layer-1 matmul).
    xu = jnp.concatenate([x, u], axis=1).astype(jnp.bfloat16)
    K = xu.shape[1]

    tb, Bp = _choose_batch_tile(B, tile_b)
    if Bp != B:
        xu = jnp.pad(xu, ((0, Bp - B), (0, 0)))
    grid = (Bp // tb,)

    row_map = lambda i: (i, 0)        # batch-blocked input
    out_map = lambda i: (0, i)        # (1, Bp) output, batch along lanes
    const_map = lambda i: (0, 0)      # weights resident across all grid steps

    H1, H2, H3 = w1.shape[1], w2.shape[1], w3.shape[1]
    flops = 2 * Bp * (K * H1 + H1 * H2 + H2 * H3 + H3 * 1)
    bytes_accessed = (
        xu.size * 2
        + sum(int(a.size) * a.dtype.itemsize
              for a in (w1, b1, w2, b2, w3, b3, w4t, b4))
        + Bp * 4)

    out = pl.pallas_call(
        critic_state_kernel,
        out_shape=jax.ShapeDtypeStruct((1, Bp), jnp.float32),
        grid=grid,
        in_specs=[
            pl.BlockSpec((tb, K), row_map),
            pl.BlockSpec(w1.shape, const_map),
            pl.BlockSpec(b1.shape, const_map),
            pl.BlockSpec(w2.shape, const_map),
            pl.BlockSpec(b2.shape, const_map),
            pl.BlockSpec(w3.shape, const_map),
            pl.BlockSpec(b3.shape, const_map),
            pl.BlockSpec(w4t.shape, const_map),
            pl.BlockSpec(b4.shape, const_map),
        ],
        out_specs=pl.BlockSpec((1, tb), out_map),
        compiler_params=pltpu.CompilerParams(
            dimension_semantics=("parallel",),
            vmem_limit_bytes=32 * 1024 * 1024),
        cost_estimate=pl.CostEstimate(flops=int(flops),
                                      transcendentals=0,
                                      bytes_accessed=int(bytes_accessed)),
    )(xu, w1, b1, w2, b2, w3, b3, w4t, b4)

    return out[0, :B, None]


# ---------------------------------------------------------------------------
# Parameter init (mirrors the PyTorch module)
# ---------------------------------------------------------------------------
def init_critic_params(key, state_dim, action_dim):
    """init_layers applies hidden_init to ALL nn.Linear layers (including the
    final one): weight ~ U(-1/sqrt(out_features), 1/sqrt(out_features))
    since weight.size(0) == out_features.  Biases keep PyTorch's default
    U(-1/sqrt(in_features), 1/sqrt(in_features)).

    Weights are stored transposed as (in_features, out_features), hidden
    widths zero-padded to lane multiples (400->512, 300->384, 100->128), and
    the final layer stored as a (1, 128) row for the transposed layer-4
    matmul.  Matmul operands are bf16; biases stay f32."""
    dims = [(state_dim + action_dim, 400), (400, 300), (300, 100), (100, 1)]
    pad_out = [512, 384, 128, 1]          # lane-padded output widths
    keys = jax.random.split(key, 2 * len(dims))
    weights, biases = [], []
    din_pad = dims[0][0]                  # layer-1 input width (no padding)
    for i, (din, dout) in enumerate(dims):
        wlim = 1.0 / np.sqrt(dout)        # hidden_init: fan_in = weight.size(0)
        blim = 1.0 / np.sqrt(din)
        w = jax.random.uniform(keys[2 * i], (din, dout), jnp.float32, -wlim, wlim)
        b = jax.random.uniform(keys[2 * i + 1], (1, dout), jnp.float32, -blim, blim)
        w = jnp.pad(w, ((0, din_pad - din), (0, pad_out[i] - dout)))
        b = jnp.pad(b, ((0, 0), (0, pad_out[i] - dout)))
        weights.append(w)
        biases.append(b)
        din_pad = pad_out[i]
    w1, w2, w3, w4 = weights
    b1, b2, b3, b4 = biases
    w4t = w4.T                            # (1, 128) row for transposed layer 4
    return (w1.astype(jnp.bfloat16), b1,
            w2.astype(jnp.bfloat16), b2,
            w3.astype(jnp.bfloat16), b3,
            w4t.astype(jnp.bfloat16), b4)


# ---------------------------------------------------------------------------
# Pure-JAX reference (same bf16-operand / f32-accumulation recipe)
# ---------------------------------------------------------------------------
def critic_state_reference(x, u, params):
    (w1, b1, w2, b2, w3, b3, w4t, b4) = params
    xu = jnp.concatenate([x, u], axis=1).astype(jnp.bfloat16)
    h = jnp.maximum(jnp.dot(xu, w1, preferred_element_type=jnp.float32) + b1, 0.0)
    h = jnp.maximum(jnp.dot(h.astype(jnp.bfloat16), w2,
                            preferred_element_type=jnp.float32) + b2, 0.0)
    h = jnp.maximum(jnp.dot(h.astype(jnp.bfloat16), w3,
                            preferred_element_type=jnp.float32) + b3, 0.0)
    out = (jnp.dot(h.astype(jnp.bfloat16), w4t.T,
                   preferred_element_type=jnp.float32) + b4[:, :1])
    return out[:, :1]


if __name__ == "__main__":
    state_dim, action_dim = 24, 8
    key = jax.random.PRNGKey(0)
    kx, ku, kp, kx2, ku2 = jax.random.split(key, 5)
    params = init_critic_params(kp, state_dim, action_dim)

    # Small batch (single 128-row tile after padding).
    batch = 4
    x = jax.random.normal(kx, (batch, state_dim), jnp.float32)
    u = jax.random.normal(ku, (batch, action_dim), jnp.float32)
    out = jax.block_until_ready(critic_state_forward(x, u, params))
    ref = critic_state_reference(x, u, params)
    assert out.shape == (batch, 1)
    np.testing.assert_allclose(np.asarray(out), np.asarray(ref),
                               rtol=1e-2, atol=1e-2)

    # Larger batch that exercises a multi-step batch grid (non-multiple of 128).
    batch2 = 600
    x2 = jax.random.normal(kx2, (batch2, state_dim), jnp.float32)
    u2 = jax.random.normal(ku2, (batch2, action_dim), jnp.float32)
    out2 = jax.block_until_ready(critic_state_forward(x2, u2, params))
    ref2 = critic_state_reference(x2, u2, params)
    assert out2.shape == (batch2, 1)
    np.testing.assert_allclose(np.asarray(out2), np.asarray(ref2),
                               rtol=1e-2, atol=1e-2)

    print("KERNEL_OK")
</pallas_src>

<mosaic_0001>
module attributes {stable_mosaic.version = 11 : i64} {
  func.func @critic_state_kernel(%arg0: i32, %arg1: memref<128x32xbf16, #tpu.memory_space<vmem>>, %arg2: memref<32x512xbf16, #tpu.memory_space<vmem>>, %arg3: memref<1x512xf32, #tpu.memory_space<vmem>>, %arg4: memref<512x384xbf16, #tpu.memory_space<vmem>>, %arg5: memref<1x384xf32, #tpu.memory_space<vmem>>, %arg6: memref<384x128xbf16, #tpu.memory_space<vmem>>, %arg7: memref<1x128xf32, #tpu.memory_space<vmem>>, %arg8: memref<1x128xbf16, #tpu.memory_space<vmem>>, %arg9: memref<1x1xf32, #tpu.memory_space<vmem>>, %arg10: memref<1x128xf32, #tpu.memory_space<vmem>>) attributes {dimension_semantics = [#tpu.dimension_semantics<parallel>], iteration_bounds = array<i64: 1>, scalar_prefetch = 0 : i64, scratch_operands = 0 : i64, tpu.core_type = #tpu.core_type<tc>, window_params = [{transform_indices = @transform_0, window_bounds = array<i64: 128, 32>}, {pipeline_mode = #tpu.pipeline_mode<synchronous>, transform_indices = @transform_1, window_bounds = array<i64: 32, 512>}, {pipeline_mode = #tpu.pipeline_mode<synchronous>, transform_indices = @transform_2, window_bounds = array<i64: 1, 512>}, {pipeline_mode = #tpu.pipeline_mode<synchronous>, transform_indices = @transform_3, window_bounds = array<i64: 512, 384>}, {pipeline_mode = #tpu.pipeline_mode<synchronous>, transform_indices = @transform_4, window_bounds = array<i64: 1, 384>}, {pipeline_mode = #tpu.pipeline_mode<synchronous>, transform_indices = @transform_5, window_bounds = array<i64: 384, 128>}, {pipeline_mode = #tpu.pipeline_mode<synchronous>, transform_indices = @transform_6, window_bounds = array<i64: 1, 128>}, {pipeline_mode = #tpu.pipeline_mode<synchronous>, transform_indices = @transform_7, window_bounds = array<i64: 1, 128>}, {pipeline_mode = #tpu.pipeline_mode<synchronous>, transform_indices = @transform_8, window_bounds = array<i64: 1, 1>}, {transform_indices = @transform_9, window_bounds = array<i64: 1, 128>}]} {
    %c0 = arith.constant 0 : index
    %c0_0 = arith.constant 0 : index
    %0 = vector.load %arg1[%c0, %c0_0] : memref<128x32xbf16, #tpu.memory_space<vmem>>, vector<128x32xbf16>
    %c0_1 = arith.constant 0 : index
    %c0_2 = arith.constant 0 : index
    %1 = vector.load %arg2[%c0_1, %c0_2] : memref<32x512xbf16, #tpu.memory_space<vmem>>, vector<32x512xbf16>
    %cst = arith.constant dense<0.000000e+00> : vector<128x512xf32>
    %2 = tpu.matmul %0, %1, %cst {dimension_numbers = #tpu.dot_dimension_numbers<[1], [0], [0], [1], [0, 0, 1, 1], [], []>} : vector<128x32xbf16>, vector<32x512xbf16>, vector<128x512xf32> -> vector<128x512xf32>
    %c0_3 = arith.constant 0 : index
    %c0_4 = arith.constant 0 : index
    %3 = vector.load %arg3[%c0_3, %c0_4] : memref<1x512xf32, #tpu.memory_space<vmem>>, vector<1x512xf32>
    %4 = vector.broadcast %3 : vector<1x512xf32> to vector<128x512xf32>
    %5 = arith.addf %2, %4 : vector<128x512xf32>
    %cst_5 = arith.constant 0.000000e+00 : f32
    %6 = vector.broadcast %cst_5 : f32 to vector<128x512xf32>
    %7 = arith.maximumf %5, %6 : vector<128x512xf32>
    %8 = arith.truncf %7 : vector<128x512xf32> to vector<128x512xbf16>
    %c0_6 = arith.constant 0 : index
    %c0_7 = arith.constant 0 : index
    %9 = vector.load %arg4[%c0_6, %c0_7] : memref<512x384xbf16, #tpu.memory_space<vmem>>, vector<512x384xbf16>
    %cst_8 = arith.constant dense<0.000000e+00> : vector<128x384xf32>
    %10 = tpu.matmul %8, %9, %cst_8 {dimension_numbers = #tpu.dot_dimension_numbers<[1], [0], [0], [1], [0, 0, 1, 1], [], []>} : vector<128x512xbf16>, vector<512x384xbf16>, vector<128x384xf32> -> vector<128x384xf32>
    %c0_9 = arith.constant 0 : index
    %c0_10 = arith.constant 0 : index
    %11 = vector.load %arg5[%c0_9, %c0_10] : memref<1x384xf32, #tpu.memory_space<vmem>>, vector<1x384xf32>
    %12 = vector.broadcast %11 : vector<1x384xf32> to vector<128x384xf32>
    %13 = arith.addf %10, %12 : vector<128x384xf32>
    %cst_11 = arith.constant 0.000000e+00 : f32
    %14 = vector.broadcast %cst_11 : f32 to vector<128x384xf32>
    %15 = arith.maximumf %13, %14 : vector<128x384xf32>
    %16 = arith.truncf %15 : vector<128x384xf32> to vector<128x384xbf16>
    %c0_12 = arith.constant 0 : index
    %c0_13 = arith.constant 0 : index
    %17 = vector.load %arg6[%c0_12, %c0_13] : memref<384x128xbf16, #tpu.memory_space<vmem>>, vector<384x128xbf16>
    %cst_14 = arith.constant dense<0.000000e+00> : vector<128x128xf32>
    %18 = tpu.matmul %16, %17, %cst_14 {dimension_numbers = #tpu.dot_dimension_numbers<[1], [0], [0], [1], [0, 0, 1, 1], [], []>} : vector<128x384xbf16>, vector<384x128xbf16>, vector<128x128xf32> -> vector<128x128xf32>
    %c0_15 = arith.constant 0 : index
    %c0_16 = arith.constant 0 : index
    %19 = vector.load %arg7[%c0_15, %c0_16] : memref<1x128xf32, #tpu.memory_space<vmem>>, vector<1x128xf32>
    %20 = vector.broadcast %19 : vector<1x128xf32> to vector<128x128xf32>
    %21 = arith.addf %18, %20 : vector<128x128xf32>
    %cst_17 = arith.constant 0.000000e+00 : f32
    %22 = vector.broadcast %cst_17 : f32 to vector<128x128xf32>
    %23 = arith.maximumf %21, %22 : vector<128x128xf32>
    %c0_18 = arith.constant 0 : index
    %c0_19 = arith.constant 0 : index
    %24 = vector.load %arg8[%c0_18, %c0_19] : memref<1x128xbf16, #tpu.memory_space<vmem>>, vector<1x128xbf16>
    %25 = arith.truncf %23 : vector<128x128xf32> to vector<128x128xbf16>
    %cst_20 = arith.constant dense<0.000000e+00> : vector<1x128xf32>
    %26 = tpu.matmul %24, %25, %cst_20 {dimension_numbers = #tpu.dot_dimension_numbers<[1], [1], [0], [0], [0, 0, 1, 0], [], []>} : vector<1x128xbf16>, vector<128x128xbf16>, vector<1x128xf32> -> vector<1x128xf32>
    %c0_21 = arith.constant 0 : index
    %c0_22 = arith.constant 0 : index
    %27 = vector.load %arg9[%c0_21, %c0_22] : memref<1x1xf32, #tpu.memory_space<vmem>>, vector<1x1xf32>
    %28 = vector.broadcast %27 : vector<1x1xf32> to vector<1x128xf32>
    %29 = arith.addf %26, %28 : vector<1x128xf32>
    %c0_23 = arith.constant 0 : index
    %c0_24 = arith.constant 0 : index
    %30 = vector.load %arg10[%c0_23, %c0_24] : memref<1x128xf32, #tpu.memory_space<vmem>>, vector<1x128xf32>
    tpu.vector_store %arg10[%c0_23, %c0_24], %29 {strides = array<i32>} : memref<1x128xf32, #tpu.memory_space<vmem>>, vector<1x128xf32>,
    return
  }
  func.func @transform_0(%arg0: i32) -> (i32, i32) {
    %c0_i32 = arith.constant 0 : i32
    %c0_i32_0 = arith.constant 0 : i32
    return %arg0, %c0_i32 : i32, i32
  }
  func.func @transform_1(%arg0: i32) -> (i32, i32) {
    %c0_i32 = arith.constant 0 : i32
    %c0_i32_0 = arith.constant 0 : i32
    %c0_i32_1 = arith.constant 0 : i32
    return %c0_i32, %c0_i32_0 : i32, i32
  }
  func.func @transform_2(%arg0: i32) -> (i32, i32) {
    %c0_i32 = arith.constant 0 : i32
    %c0_i32_0 = arith.constant 0 : i32
    %c0_i32_1 = arith.constant 0 : i32
    return %c0_i32, %c0_i32_0 : i32, i32
  }
  func.func @transform_3(%arg0: i32) -> (i32, i32) {
    %c0_i32 = arith.constant 0 : i32
    %c0_i32_0 = arith.constant 0 : i32
    %c0_i32_1 = arith.constant 0 : i32
    return %c0_i32, %c0_i32_0 : i32, i32
  }
  func.func @transform_4(%arg0: i32) -> (i32, i32) {
    %c0_i32 = arith.constant 0 : i32
    %c0_i32_0 = arith.constant 0 : i32
    %c0_i32_1 = arith.constant 0 : i32
    return %c0_i32, %c0_i32_0 : i32, i32
  }
  func.func @transform_5(%arg0: i32) -> (i32, i32) {
    %c0_i32 = arith.constant 0 : i32
    %c0_i32_0 = arith.constant 0 : i32
    %c0_i32_1 = arith.constant 0 : i32
    return %c0_i32, %c0_i32_0 : i32, i32
  }
  func.func @transform_6(%arg0: i32) -> (i32, i32) {
    %c0_i32 = arith.constant 0 : i32
    %c0_i32_0 = arith.constant 0 : i32
    %c0_i32_1 = arith.constant 0 : i32
    return %c0_i32, %c0_i32_0 : i32, i32
  }
  func.func @transform_7(%arg0: i32) -> (i32, i32) {
    %c0_i32 = arith.constant 0 : i32
    %c0_i32_0 = arith.constant 0 : i32
    %c0_i32_1 = arith.constant 0 : i32
    return %c0_i32, %c0_i32_0 : i32, i32
  }
  func.func @transform_8(%arg0: i32) -> (i32, i32) {
    %c0_i32 = arith.constant 0 : i32
    %c0_i32_0 = arith.constant 0 : i32
    %c0_i32_1 = arith.constant 0 : i32
    return %c0_i32, %c0_i32_0 : i32, i32
  }
  func.func @transform_9(%arg0: i32) -> (i32, i32) {
    %c0_i32 = arith.constant 0 : i32
    %c0_i32_0 = arith.constant 0 : i32
    return %c0_i32, %arg0 : i32, i32
  }
}

</mosaic_0001>

<llo_original>
// kernel: tpu_custom_call.1
$region0: #{tpu_custom_call.1}
  #allocation0 [shape = 'u32[]', space=smem, size = 0x4, offset = 0x4, fixed_abs, tag = 'smem constant byte address 0x4 - core index']
  #allocation1 [shape = 'u32[144,128]{1,0:T(1,128)}', space=vmem, size = 0x12000, scoped, tag = 'internal scratch']
  #allocation2 [shape = 'f32[1,1]{1,0:T(1,128)S(1)}', space=vmem, size = 0x200, scoped, tag = 'scoped memory for tpu_custom_call.1']
  %s0 = inlined_call_operand.vmem [shape: bf16[128,32], index: 0, kind: input, shape index: {}]
  %s1 = inlined_call_operand.vmem [shape: bf16[32,512], index: 1, kind: input, shape index: {}]
  %s2 = inlined_call_operand.vmem [shape: f32[1,512], index: 2, kind: input, shape index: {}]
  %s3 = inlined_call_operand.hbm [shape: bf16[512,384], index: 3, kind: input, shape index: {}]
  %s4 = inlined_call_operand.vmem [shape: f32[1,384], index: 4, kind: input, shape index: {}]
  %s5 = inlined_call_operand.hbm [shape: bf16[384,128], index: 5, kind: input, shape index: {}]
  %s6 = inlined_call_operand.vmem [shape: f32[1,128], index: 6, kind: input, shape index: {}]
  %s7 = inlined_call_operand.vmem [shape: bf16[1,128], index: 7, kind: input, shape index: {}]
  %s8 = inlined_call_operand.<no memory space> [shape: f32[1,1], index: 8, kind: input, shape index: {}]
  %s9 = inlined_call_operand.hbm [shape: f32[1,128], index: 9, kind: output, shape index: {}]
  %s10 = sld [smem:[#allocation0]]
  $region54: #{tpu_custom_call.1} parent=0
    _
  %s12 = ssub.s32 1, %s10
  %s13 = scalar_select 0, %s12, %s10
  %v14 = vstv %s8
  %15 = vst [vmem:[#allocation2] sm:$0x1] %v14
  $region1: #{tpu_custom_call.1} parent=0
    #allocation3 [shape = 'u8[393216]{0}', space=vmem, size = 0x60000, scoped, tag = 'input window, operand 3, single buffered']
    #allocation4 [shape = 's32[1]{0}', space=sflag, size = 0x4, scoped, tag = 'scoped memory for tpu_custom_call.1']
    #allocation5 [shape = 's32[1]{0}', space=sflag, size = 0x4, scoped, tag = 'scoped memory for tpu_custom_call.1']
    #allocation6 [shape = 'u8[98304]{0}', space=vmem, size = 0x18000, scoped, tag = 'input window, operand 5, single buffered']
    #allocation7 [shape = 's32[1]{0}', space=sflag, size = 0x4, scoped, tag = 'scoped memory for tpu_custom_call.1']
    #allocation8 [shape = 'u8[512]{0}', space=vmem, size = 0x400, scoped, tag = 'output window, operand 0, single buffered']
    %16 = vsyncpa [#allocation4], 0
    %17 = vsyncpa [#allocation7], 0
    %18 = vsyncpa [#allocation5], 0
    // Predicated region
    $region2: #{tpu_custom_call.1} parent=1 // pred_check
      _
    $region3: #{tpu_custom_call.1} parent=1 // pred_check_branch
      %20 = sbr.rel (0) target = $region5
    $region4: #{tpu_custom_call.1} parent=1 // pred_region
      _
    $region5: #{tpu_custom_call.1} parent=1 // pred_fallthru
      _
    // Predicated region
    $region6: #{tpu_custom_call.1} parent=1 // pred_check
      _
    $region7: #{tpu_custom_call.1} parent=1 // pred_check_branch
      %22 = sbr.rel (0) target = $region9
    $region8: #{tpu_custom_call.1} parent=1 // pred_region
      _
    $region9: #{tpu_custom_call.1} parent=1 // pred_fallthru
      _
    // Predicated region
    $region10: #{tpu_custom_call.1} parent=1 // pred_check
      _
    $region11: #{tpu_custom_call.1} parent=1 // pred_check_branch
      %24 = sbr.rel (0) target = $region13
    $region12: #{tpu_custom_call.1} parent=1 // pred_region
      _
    $region13: #{tpu_custom_call.1} parent=1 // pred_fallthru
      _
    // Predicated region
    $region14: #{tpu_custom_call.1} parent=1 // pred_check
      _
    $region15: #{tpu_custom_call.1} parent=1 // pred_check_branch
      %26 = sbr.rel (0) target = $region17
    $region16: #{tpu_custom_call.1} parent=1 // pred_region
      %s28 = ssub.s32 12288, 12288
      %29 = vsyncadd [#allocation4], %s28
      %s30 = sshll.u32 [#allocation3], 4
      %s31 = int_to_ptr.vmem [resolvable:$true] %s30
      %36 = dma.hbm_to_vmem [thread:$0]  %s3, 12288, %s31, [#allocation4], 192, 192, 12
    $region17: #{tpu_custom_call.1} parent=1 // pred_fallthru
      _
    // Predicated region
    $region18: #{tpu_custom_call.1} parent=1 // pred_check
      _
    $region19: #{tpu_custom_call.1} parent=1 // pred_check_branch
      %38 = sbr.rel (0) target = $region21
    $region20: #{tpu_custom_call.1} parent=1 // pred_region
      _
    $region21: #{tpu_custom_call.1} parent=1 // pred_fallthru
      _
    // Predicated region
    $region22: #{tpu_custom_call.1} parent=1 // pred_check
      _
    $region23: #{tpu_custom_call.1} parent=1 // pred_check_branch
      %40 = sbr.rel (0) target = $region25
    $region24: #{tpu_custom_call.1} parent=1 // pred_region
      %s42 = ssub.s32 3072, 3072
      %43 = vsyncadd [#allocation7], %s42
      %s44 = sshll.u32 [#allocation6], 4
      %s45 = int_to_ptr.vmem [resolvable:$true] %s44
      %50 = dma.hbm_to_vmem [thread:$0]  %s5, 3072, %s45, [#allocation7], 64, 64, 4
    $region25: #{tpu_custom_call.1} parent=1 // pred_fallthru
      _
    // Predicated region
    $region26: #{tpu_custom_call.1} parent=1 // pred_check
      _
    $region27: #{tpu_custom_call.1} parent=1 // pred_check_branch
      %52 = sbr.rel (0) target = $region29
    $region28: #{tpu_custom_call.1} parent=1 // pred_region
      _
    $region29: #{tpu_custom_call.1} parent=1 // pred_fallthru
      _
    // Predicated region
    $region30: #{tpu_custom_call.1} parent=1 // pred_check
      _
    $region31: #{tpu_custom_call.1} parent=1 // pred_check_branch
      %54 = sbr.rel (0) target = $region33
    $region32: #{tpu_custom_call.1} parent=1 // pred_region
      _
    $region33: #{tpu_custom_call.1} parent=1 // pred_fallthru
      _
    // Predicated region
    $region34: #{tpu_custom_call.1} parent=1 // pred_check
      _
    $region35: #{tpu_custom_call.1} parent=1 // pred_check_branch
      %56 = sbr.rel (0) target = $region37
    $region36: #{tpu_custom_call.1} parent=1 // pred_region
      _
    $region37: #{tpu_custom_call.1} parent=1 // pred_fallthru
      _
    // Predicated region
    $region38: #{tpu_custom_call.1} parent=1 // pred_check
      _
    $region39: #{tpu_custom_call.1} parent=1 // pred_check_branch
      %58 = sbr.rel (0) target = $region41
    $region40: #{tpu_custom_call.1} parent=1 // pred_region
      %59 = dma.done [#allocation4], 12288
    $region41: #{tpu_custom_call.1} parent=1 // pred_fallthru
      _
    // Predicated region
    $region42: #{tpu_custom_call.1} parent=1 // pred_check
      _
    $region43: #{tpu_custom_call.1} parent=1 // pred_check_branch
      %61 = sbr.rel (0) target = $region45
    $region44: #{tpu_custom_call.1} parent=1 // pred_region
      %62 = dma.done [#allocation7], 3072
    $region45: #{tpu_custom_call.1} parent=1 // pred_fallthru
      _
    %v64 = vld [vmem:[%s0] sm:$0xf]
    %v65 = vld [vmem:[%s0 + $0x4] sm:$0xf]
    %v66 = vld [vmem:[%s0 + $0x8] sm:$0xf]
    %v67 = vld [vmem:[%s0 + $0xc] sm:$0xf]
    %v68 = vld [vmem:[%s0 + $0x10] sm:$0xf]
    %v69 = vld [vmem:[%s0 + $0x14] sm:$0xf]
    %v70 = vld [vmem:[%s0 + $0x18] sm:$0xf]
    %v71 = vld [vmem:[%s0 + $0x1c] sm:$0xf]
    %v72 = vld [vmem:[%s0 + $0x20] sm:$0xf]
    %v73 = vld [vmem:[%s0 + $0x24] sm:$0xf]
    %v74 = vld [vmem:[%s0 + $0x28] sm:$0xf]
    %v75 = vld [vmem:[%s0 + $0x2c] sm:$0xf]
    %v76 = vld [vmem:[%s0 + $0x30] sm:$0xf]
    %v77 = vld [vmem:[%s0 + $0x34] sm:$0xf]
    %v78 = vld [vmem:[%s0 + $0x38] sm:$0xf]
    %v79 = vld [vmem:[%s0 + $0x3c] sm:$0xf]
    %v80 = vld [vmem:[%s1] sm:$0xff]
    %v81 = vld [vmem:[%s1 + $0x8] sm:$0xff]
    %v82 = vld [vmem:[%s1 + $0x10] sm:$0xff]
    %v83 = vld [vmem:[%s1 + $0x18] sm:$0xff]
    %v84 = vld [vmem:[%s1 + $0x20] sm:$0xff]
    %v85 = vld [vmem:[%s1 + $0x28] sm:$0xff]
    %v86 = vld [vmem:[%s1 + $0x30] sm:$0xff]
    %v87 = vld [vmem:[%s1 + $0x38] sm:$0xff]
    %v88 = vld [vmem:[%s2] sm:$0xf]
    %v90 = vlaneseq
    %v91 = vshrl.u32 %v90, 7
    %v92 = vsub.s32 0, %v91
    %v93 = vrot.slane %v88, %v92
    %v94 = vlaneseq
    %v95 = vshrl.u32 %v94, 7
    %v96 = vsub.s32 1, %v95
    %v97 = vrot.slane %v88, %v96
    %v98 = vlaneseq
    %v99 = vshrl.u32 %v98, 7
    %v100 = vsub.s32 2, %v99
    %v101 = vrot.slane %v88, %v100
    %v102 = vlaneseq
    %v103 = vshrl.u32 %v102, 7
    %v104 = vsub.s32 3, %v103
    %v105 = vrot.slane %v88, %v104
    %v126 = vunpack.c.l.b16 %v64
    %v127 = vunpack.c.l.b16 %v65
    %v128 = vunpack.c.l.b16 %v66
    %v129 = vunpack.c.l.b16 %v67
    %v130 = vunpack.c.l.b16 %v68
    %v131 = vunpack.c.l.b16 %v69
    %v132 = vunpack.c.l.b16 %v70
    %v133 = vunpack.c.l.b16 %v71
    %v134 = vunpack.c.l.b16 %v72
    %v135 = vunpack.c.l.b16 %v73
    %v136 = vunpack.c.l.b16 %v74
    %v137 = vunpack.c.l.b16 %v75
    %v138 = vunpack.c.l.b16 %v76
    %v139 = vunpack.c.l.b16 %v77
    %v140 = vunpack.c.l.b16 %v78
    %v141 = vunpack.c.l.b16 %v79
    %v142 = vpack.c.b16 %v127, %v126
    %v143 = vpack.c.b16 %v129, %v128
    %v144 = vpack.c.b16 %v131, %v130
    %v145 = vpack.c.b16 %v133, %v132
    %v146 = vpack.c.b16 %v135, %v134
    %v147 = vpack.c.b16 %v137, %v136
    %v148 = vpack.c.b16 %v139, %v138
    %v149 = vpack.c.b16 %v141, %v140
    %v158 = vunpack.c.l.b16 %v80
    %v159 = vunpack.c.h.b16 %v80
    %v160 = vunpack.c.l.b16 %v81
    %v161 = vunpack.c.h.b16 %v81
    %v162 = vunpack.c.l.b16 %v82
    %v163 = vunpack.c.h.b16 %v82
    %v164 = vunpack.c.l.b16 %v83
    %v165 = vunpack.c.h.b16 %v83
    %v166 = vunpack.c.l.b16 %v84
    %v167 = vunpack.c.h.b16 %v84
    %v168 = vunpack.c.l.b16 %v85
    %v169 = vunpack.c.h.b16 %v85
    %v170 = vunpack.c.l.b16 %v86
    %v171 = vunpack.c.h.b16 %v86
    %v172 = vunpack.c.l.b16 %v87
    %v173 = vunpack.c.h.b16 %v87
    %v174 = vpack.c.b16 %v162, %v158
    %v175 = vpack.c.b16 %v163, %v159
    %v176 = vpack.c.b16 %v164, %v160
    %v177 = vpack.c.b16 %v165, %v161
    %v178 = vpack.c.b16 %v170, %v166
    %v179 = vpack.c.b16 %v171, %v167
    %v180 = vpack.c.b16 %v172, %v168
    %v181 = vpack.c.b16 %v173, %v169
    %vm190 = vcmask 261120
    %v192 = vsel %vm190, %v142, 0
    %v195 = vsel %vm190, %v143, 0
    %v198 = vsel %vm190, %v144, 0
    %v201 = vsel %vm190, %v145, 0
    %v204 = vsel %vm190, %v146, 0
    %v207 = vsel %vm190, %v147, 0
    %v210 = vsel %vm190, %v148, 0
    %v213 = vsel %vm190, %v149, 0
    %215 = vmatprep.subr.bf16.mxu0 %v175
    %216 = vmatpush1.bf16.msra.mxu0 %v174
    %217 = vmatprep.subr.bf16.mxu0 %v179
    %218 = vmatpush1.bf16.msra.mxu0 %v178
    %219 = vmatprep.subr.bf16.mxu0 0
    %220 = vmatpush1.bf16.msra.mxu0 0
    %221 = vmatprep.subr.bf16.mxu0 0
    %222 = vmatpush1.bf16.msra.mxu0 0
    %223 = vmatprep.subr.bf16.mxu0 0
    %224 = vmatpush1.bf16.msra.mxu0 0
    %225 = vmatprep.subr.bf16.mxu0 0
    %226 = vmatpush1.bf16.msra.mxu0 0
    %227 = vmatprep.subr.bf16.mxu0 0
    %228 = vmatpush1.bf16.msra.mxu0 0
    %229 = vmatprep.subr.bf16.mxu0 0
    %230 = vmatpush1.bf16.msra.mxu0 0
    %231 = vmatprep.subr.bf16.mxu0 0
    %232 = vmatpush1.bf16.msra.mxu0 0
    %233 = vmatprep.subr.bf16.mxu0 0
    %234 = vmatpush1.bf16.msra.mxu0 0
    %235 = vmatprep.subr.bf16.mxu0 0
    %236 = vmatpush1.bf16.msra.mxu0 0
    %237 = vmatprep.subr.bf16.mxu0 0
    %238 = vmatpush1.bf16.msra.mxu0 0
    %239 = vmatprep.subr.bf16.mxu0 0
    %240 = vmatpush1.bf16.msra.mxu0 0
    %241 = vmatprep.subr.bf16.mxu0 0
    %242 = vmatpush1.bf16.msra.mxu0 0
    %243 = vmatprep.subr.bf16.mxu0 0
    %244 = vmatpush1.bf16.msra.mxu0 0
    %245 = vmatprep.subr.bf16.mxu0 0
    %246 = vmatpush1.bf16.msra.mxu0 0
    %247 = vmatprep.mubr.bf16.mxu0 0
    %248 = vmatmul.mubr.bf16.gmra.mrb[0].mxu0 %v192
    %v249 = vpop.f32.mrb[0].mxu0
    %v250 = vadd.f32 %v93, %v249
    %v251 = vpop.f32.mrb[0].mxu0
    %v252 = vadd.f32 %v97, %v251
    %v253 = vpop.f32.mrb[0].mxu0
    %v254 = vadd.f32 %v93, %v253
    %v255 = vpop.f32.mrb[0].mxu0
    %v256 = vadd.f32 %v97, %v255
    %257 = vmatprep.mubr.bf16.mxu0 0
    %258 = vmatmul.mubr.bf16.gmra.mrb[0].mxu0 %v195
    %v259 = vpop.f32.mrb[0].mxu0
    %v260 = vadd.f32 %v93, %v259
    %v261 = vpop.f32.mrb[0].mxu0
    %v262 = vadd.f32 %v97, %v261
    %v263 = vpop.f32.mrb[0].mxu0
    %v264 = vadd.f32 %v93, %v263
    %v265 = vpop.f32.mrb[0].mxu0
    %v266 = vadd.f32 %v97, %v265
    %267 = vmatprep.mubr.bf16.mxu0 0
    %268 = vmatmul.mubr.bf16.gmra.mrb[0].mxu0 %v198
    %v269 = vpop.f32.mrb[0].mxu0
    %v270 = vadd.f32 %v93, %v269
    %v271 = vpop.f32.mrb[0].mxu0
    %v272 = vadd.f32 %v97, %v271
    %v273 = vpop.f32.mrb[0].mxu0
    %v274 = vadd.f32 %v93, %v273
    %v275 = vpop.f32.mrb[0].mxu0
    %v276 = vadd.f32 %v97, %v275
    %277 = vmatprep.mubr.bf16.mxu0 0
    %278 = vmatmul.mubr.bf16.gmra.mrb[0].mxu0 %v201
    %v279 = vpop.f32.mrb[0].mxu0
    %v280 = vadd.f32 %v93, %v279
    %v281 = vpop.f32.mrb[0].mxu0
    %v282 = vadd.f32 %v97, %v281
    %v283 = vpop.f32.mrb[0].mxu0
    %v284 = vadd.f32 %v93, %v283
    %v285 = vpop.f32.mrb[0].mxu0
    %v286 = vadd.f32 %v97, %v285
    %287 = vmatprep.mubr.bf16.mxu0 0
    %288 = vmatmul.mubr.bf16.gmra.mrb[0].mxu0 %v204
    %v289 = vpop.f32.mrb[0].mxu0
    %v290 = vadd.f32 %v93, %v289
    %v291 = vpop.f32.mrb[0].mxu0
    %v292 = vadd.f32 %v97, %v291
    %v293 = vpop.f32.mrb[0].mxu0
    %v294 = vadd.f32 %v93, %v293
    %v295 = vpop.f32.mrb[0].mxu0
    %v296 = vadd.f32 %v97, %v295
    %297 = vmatprep.mubr.bf16.mxu0 0
    %298 = vmatmul.mubr.bf16.gmra.mrb[0].mxu0 %v207
    %v299 = vpop.f32.mrb[0].mxu0
    %v300 = vadd.f32 %v93, %v299
    %v301 = vpop.f32.mrb[0].mxu0
    %v302 = vadd.f32 %v97, %v301
    %v303 = vpop.f32.mrb[0].mxu0
    %v304 = vadd.f32 %v93, %v303
    %v305 = vpop.f32.mrb[0].mxu0
    %v306 = vadd.f32 %v97, %v305
    %307 = vmatprep.mubr.bf16.mxu0 0
    %308 = vmatmul.mubr.bf16.gmra.mrb[0].mxu0 %v210
    %v309 = vpop.f32.mrb[0].mxu0
    %v310 = vadd.f32 %v93, %v309
    %v311 = vpop.f32.mrb[0].mxu0
    %v312 = vadd.f32 %v97, %v311
    %v313 = vpop.f32.mrb[0].mxu0
    %v314 = vadd.f32 %v93, %v313
    %v315 = vpop.f32.mrb[0].mxu0
    %v316 = vadd.f32 %v97, %v315
    %317 = vmatprep.mubr.bf16.mxu0 0
    %318 = vmatmul.mubr.bf16.gmra.mrb[0].mxu0 %v213
    %v319 = vpop.f32.mrb[0].mxu0
    %v320 = vadd.f32 %v93, %v319
    %v321 = vpop.f32.mrb[0].mxu0
    %v322 = vadd.f32 %v97, %v321
    %v323 = vpop.f32.mrb[0].mxu0
    %v324 = vadd.f32 %v93, %v323
    %v325 = vpop.f32.mrb[0].mxu0
    %v326 = vadd.f32 %v97, %v325
    %327 = vdwg.mxu0
    %328 = vmatprep.subr.bf16.mxu0 %v177
    %329 = vmatpush1.bf16.msra.mxu0 %v176
    %330 = vmatprep.subr.bf16.mxu0 %v181
    %331 = vmatpush1.bf16.msra.mxu0 %v180
    %332 = vmatprep.subr.bf16.mxu0 0
    %333 = vmatpush1.bf16.msra.mxu0 0
    %334 = vmatprep.subr.bf16.mxu0 0
    %335 = vmatpush1.bf16.msra.mxu0 0
    %336 = vmatprep.subr.bf16.mxu0 0
    %337 = vmatpush1.bf16.msra.mxu0 0
    %338 = vmatprep.subr.bf16.mxu0 0
    %339 = vmatpush1.bf16.msra.mxu0 0
    %340 = vmatprep.subr.bf16.mxu0 0
    %341 = vmatpush1.bf16.msra.mxu0 0
    %342 = vmatprep.subr.bf16.mxu0 0
    %343 = vmatpush1.bf16.msra.mxu0 0
    %344 = vmatprep.subr.bf16.mxu0 0
    %345 = vmatpush1.bf16.msra.mxu0 0
    %346 = vmatprep.subr.bf16.mxu0 0
    %347 = vmatpush1.bf16.msra.mxu0 0
    %348 = vmatprep.subr.bf16.mxu0 0
    %349 = vmatpush1.bf16.msra.mxu0 0
    %350 = vmatprep.subr.bf16.mxu0 0
    %351 = vmatpush1.bf16.msra.mxu0 0
    %352 = vmatprep.subr.bf16.mxu0 0
    %353 = vmatpush1.bf16.msra.mxu0 0
    %354 = vmatprep.subr.bf16.mxu0 0
    %355 = vmatpush1.bf16.msra.mxu0 0
    %356 = vmatprep.subr.bf16.mxu0 0
    %357 = vmatpush1.bf16.msra.mxu0 0
    %358 = vmatprep.subr.bf16.mxu0 0
    %359 = vmatpush1.bf16.msra.mxu0 0
    %360 = vmatprep.mubr.bf16.mxu0 0
    %361 = vmatmul.mubr.bf16.gmra.mrb[0].mxu0 %v192
    %v362 = vpop.f32.mrb[0].mxu0
    %v363 = vadd.f32 %v101, %v362
    %v364 = vpop.f32.mrb[0].mxu0
    %v365 = vadd.f32 %v105, %v364
    %v366 = vpop.f32.mrb[0].mxu0
    %v367 = vadd.f32 %v101, %v366
    %v368 = vpop.f32.mrb[0].mxu0
    %v369 = vadd.f32 %v105, %v368
    %370 = vmatprep.mubr.bf16.mxu0 0
    %371 = vmatmul.mubr.bf16.gmra.mrb[0].mxu0 %v195
    %v372 = vpop.f32.mrb[0].mxu0
    %v373 = vadd.f32 %v101, %v372
    %v374 = vpop.f32.mrb[0].mxu0
    %v375 = vadd.f32 %v105, %v374
    %v376 = vpop.f32.mrb[0].mxu0
    %v377 = vadd.f32 %v101, %v376
    %v378 = vpop.f32.mrb[0].mxu0
    %v379 = vadd.f32 %v105, %v378
    %380 = vmatprep.mubr.bf16.mxu0 0
    %381 = vmatmul.mubr.bf16.gmra.mrb[0].mxu0 %v198
    %v382 = vpop.f32.mrb[0].mxu0
    %v383 = vadd.f32 %v101, %v382
    %v384 = vpop.f32.mrb[0].mxu0
    %v385 = vadd.f32 %v105, %v384
    %v386 = vpop.f32.mrb[0].mxu0
    %v387 = vadd.f32 %v101, %v386
    %v388 = vpop.f32.mrb[0].mxu0
    %v389 = vadd.f32 %v105, %v388
    %390 = vmatprep.mubr.bf16.mxu0 0
    %391 = vmatmul.mubr.bf16.gmra.mrb[0].mxu0 %v201
    %v392 = vpop.f32.mrb[0].mxu0
    %v393 = vadd.f32 %v101, %v392
    %v394 = vpop.f32.mrb[0].mxu0
    %v395 = vadd.f32 %v105, %v394
    %v396 = vpop.f32.mrb[0].mxu0
    %v397 = vadd.f32 %v101, %v396
    %v398 = vpop.f32.mrb[0].mxu0
    %v399 = vadd.f32 %v105, %v398
    %400 = vmatprep.mubr.bf16.mxu0 0
    %401 = vmatmul.mubr.bf16.gmra.mrb[0].mxu0 %v204
    %v402 = vpop.f32.mrb[0].mxu0
    %v403 = vadd.f32 %v101, %v402
    %v404 = vpop.f32.mrb[0].mxu0
    %v405 = vadd.f32 %v105, %v404
    %v406 = vpop.f32.mrb[0].mxu0
    %v407 = vadd.f32 %v101, %v406
    %v408 = vpop.f32.mrb[0].mxu0
    %v409 = vadd.f32 %v105, %v408
    %410 = vmatprep.mubr.bf16.mxu0 0
    %411 = vmatmul.mubr.bf16.gmra.mrb[0].mxu0 %v207
    %v412 = vpop.f32.mrb[0].mxu0
    %v413 = vadd.f32 %v101, %v412
    %v414 = vpop.f32.mrb[0].mxu0
    %v415 = vadd.f32 %v105, %v414
    %v416 = vpop.f32.mrb[0].mxu0
    %v417 = vadd.f32 %v101, %v416
    %v418 = vpop.f32.mrb[0].mxu0
    %v419 = vadd.f32 %v105, %v418
    %420 = vmatprep.mubr.bf16.mxu0 0
    %421 = vmatmul.mubr.bf16.gmra.mrb[0].mxu0 %v210
    %v422 = vpop.f32.mrb[0].mxu0
    %v423 = vadd.f32 %v101, %v422
    %v424 = vpop.f32.mrb[0].mxu0
    %v425 = vadd.f32 %v105, %v424
    %v426 = vpop.f32.mrb[0].mxu0
    %v427 = vadd.f32 %v101, %v426
    %v428 = vpop.f32.mrb[0].mxu0
    %v429 = vadd.f32 %v105, %v428
    %430 = vmatprep.mubr.bf16.mxu0 0
    %431 = vmatmul.mubr.bf16.gmra.mrb[0].mxu0 %v213
    %v432 = vpop.f32.mrb[0].mxu0
    %v433 = vadd.f32 %v101, %v432
    %v434 = vpop.f32.mrb[0].mxu0
    %v435 = vadd.f32 %v105, %v434
    %v436 = vpop.f32.mrb[0].mxu0
    %v437 = vadd.f32 %v101, %v436
    %v438 = vpop.f32.mrb[0].mxu0
    %v439 = vadd.f32 %v105, %v438
    %440 = vdwg.mxu0
    %v441 = vmax.f32 %v250, 0.0
    %v442 = vmax.f32 %v252, 0.0
    %v443 = vmax.f32 %v363, 0.0
    %v444 = vmax.f32 %v365, 0.0
    %v445 = vmax.f32 %v254, 0.0
    %v446 = vmax.f32 %v256, 0.0
    %v447 = vmax.f32 %v367, 0.0
    %v448 = vmax.f32 %v369, 0.0
    %v449 = vmax.f32 %v260, 0.0
    %v450 = vmax.f32 %v262, 0.0
    %v451 = vmax.f32 %v373, 0.0
    %v452 = vmax.f32 %v375, 0.0
    %v453 = vmax.f32 %v264, 0.0
    %v454 = vmax.f32 %v266, 0.0
    %v455 = vmax.f32 %v377, 0.0
    %v456 = vmax.f32 %v379, 0.0
    %v457 = vmax.f32 %v270, 0.0
    %v458 = vmax.f32 %v272, 0.0
    %v459 = vmax.f32 %v383, 0.0
    %v460 = vmax.f32 %v385, 0.0
    %v461 = vmax.f32 %v274, 0.0
    %v462 = vmax.f32 %v276, 0.0
    %v463 = vmax.f32 %v387, 0.0
    %v464 = vmax.f32 %v389, 0.0
    %v465 = vmax.f32 %v280, 0.0
    %v466 = vmax.f32 %v282, 0.0
    %v467 = vmax.f32 %v393, 0.0
    %v468 = vmax.f32 %v395, 0.0
    %v469 = vmax.f32 %v284, 0.0
    %v470 = vmax.f32 %v286, 0.0
    %v471 = vmax.f32 %v397, 0.0
    %v472 = vmax.f32 %v399, 0.0
    %v473 = vmax.f32 %v290, 0.0
    %v474 = vmax.f32 %v292, 0.0
    %v475 = vmax.f32 %v403, 0.0
    %v476 = vmax.f32 %v405, 0.0
    %v477 = vmax.f32 %v294, 0.0
    %v478 = vmax.f32 %v296, 0.0
    %v479 = vmax.f32 %v407, 0.0
    %v480 = vmax.f32 %v409, 0.0
    %v481 = vmax.f32 %v300, 0.0
    %v482 = vmax.f32 %v302, 0.0
    %v483 = vmax.f32 %v413, 0.0
    %v484 = vmax.f32 %v415, 0.0
    %v485 = vmax.f32 %v304, 0.0
    %v486 = vmax.f32 %v306, 0.0
    %v487 = vmax.f32 %v417, 0.0
    %v488 = vmax.f32 %v419, 0.0
    %v489 = vmax.f32 %v310, 0.0
    %v490 = vmax.f32 %v312, 0.0
    %v491 = vmax.f32 %v423, 0.0
    %v492 = vmax.f32 %v425, 0.0
    %v493 = vmax.f32 %v314, 0.0
    %v494 = vmax.f32 %v316, 0.0
    %v495 = vmax.f32 %v427, 0.0
    %v496 = vmax.f32 %v429, 0.0
    %v497 = vmax.f32 %v320, 0.0
    %v498 = vmax.f32 %v322, 0.0
    %v499 = vmax.f32 %v433, 0.0
    %v500 = vmax.f32 %v435, 0.0
    %v501 = vmax.f32 %v324, 0.0
    %v502 = vmax.f32 %v326, 0.0
    %v503 = vmax.f32 %v437, 0.0
    %v504 = vmax.f32 %v439, 0.0
    %v505 = vpack.c.bf16 %v445, %v441
    %v506 = vpack.c.bf16 %v446, %v442
    %v507 = vpack.c.bf16 %v447, %v443
    %v508 = vpack.c.bf16 %v448, %v444
    %v509 = vpack.c.bf16 %v453, %v449
    %v510 = vpack.c.bf16 %v454, %v450
    %v511 = vpack.c.bf16 %v455, %v451
    %v512 = vpack.c.bf16 %v456, %v452
    %v513 = vpack.c.bf16 %v461, %v457
    %v514 = vpack.c.bf16 %v462, %v458
    %v515 = vpack.c.bf16 %v463, %v459
    %v516 = vpack.c.bf16 %v464, %v460
    %v517 = vpack.c.bf16 %v469, %v465
    %v518 = vpack.c.bf16 %v470, %v466
    %v519 = vpack.c.bf16 %v471, %v467
    %v520 = vpack.c.bf16 %v472, %v468
    %v521 = vpack.c.bf16 %v477, %v473
    %v522 = vpack.c.bf16 %v478, %v474
    %v523 = vpack.c.bf16 %v479, %v475
    %v524 = vpack.c.bf16 %v480, %v476
    %v525 = vpack.c.bf16 %v485, %v481
    %v526 = vpack.c.bf16 %v486, %v482
    %v527 = vpack.c.bf16 %v487, %v483
    %v528 = vpack.c.bf16 %v488, %v484
    %v529 = vpack.c.bf16 %v493, %v489
    %v530 = vpack.c.bf16 %v494, %v490
    %v531 = vpack.c.bf16 %v495, %v491
    %v532 = vpack.c.bf16 %v496, %v492
    %v533 = vpack.c.bf16 %v501, %v497
    %v534 = vpack.c.bf16 %v502, %v498
    %v535 = vpack.c.bf16 %v503, %v499
    %v536 = vpack.c.bf16 %v504, %v500
    %v537 = vld [vmem:[#allocation3] sm:$0xff]
    %v538 = vld [vmem:[#allocation3 + $0x8] sm:$0xf]
    %v539 = vld [vmem:[#allocation3 + $0xc] sm:$0xff]
    %v540 = vld [vmem:[#allocation3 + $0x14] sm:$0xf]
    %v541 = vld [vmem:[#allocation3 + $0x18] sm:$0xff]
    %v542 = vld [vmem:[#allocation3 + $0x20] sm:$0xf]
    %v543 = vld [vmem:[#allocation3 + $0x24] sm:$0xff]
    %v544 = vld [vmem:[#allocation3 + $0x2c] sm:$0xf]
    %v545 = vld [vmem:[#allocation3 + $0x30] sm:$0xff]
    %v546 = vld [vmem:[#allocation3 + $0x38] sm:$0xf]
    %v547 = vld [vmem:[#allocation3 + $0x3c] sm:$0xff]
    %v548 = vld [vmem:[#allocation3 + $0x44] sm:$0xf]
    %v549 = vld [vmem:[#allocation3 + $0x48] sm:$0xff]
    %v550 = vld [vmem:[#allocation3 + $0x50] sm:$0xf]
    %v551 = vld [vmem:[#allocation3 + $0x54] sm:$0xff]
    %v552 = vld [vmem:[#allocation3 + $0x5c] sm:$0xf]
    %v553 = vld [vmem:[#allocation3 + $0x60] sm:$0xff]
    %v554 = vld [vmem:[#allocation3 + $0x68] sm:$0xf]
    %v555 = vld [vmem:[#allocation3 + $0x6c] sm:$0xff]
    %v556 = vld [vmem:[#allocation3 + $0x74] sm:$0xf]
    %v557 = vld [vmem:[#allocation3 + $0x78] sm:$0xff]
    %v558 = vld [vmem:[#allocation3 + $0x80] sm:$0xf]
    %v559 = vld [vmem:[#allocation3 + $0x84] sm:$0xff]
    %v560 = vld [vmem:[#allocation3 + $0x8c] sm:$0xf]
    %v561 = vld [vmem:[#allocation3 + $0x90] sm:$0xff]
    %v562 = vld [vmem:[#allocation3 + $0x98] sm:$0xf]
    %v563 = vld [vmem:[#allocation3 + $0x9c] sm:$0xff]
    %v564 = vld [vmem:[#allocation3 + $0xa4] sm:$0xf]
    %v565 = vld [vmem:[#allocation3 + $0xa8] sm:$0xff]
    %v566 = vld [vmem:[#allocation3 + $0xb0] sm:$0xf]
    %v567 = vld [vmem:[#allocation3 + $0xb4] sm:$0xff]
    %v568 = vld [vmem:[#allocation3 + $0xbc] sm:$0xf]
    %v569 = vld [vmem:[#allocation3 + $0xc0] sm:$0xff]
    %v570 = vld [vmem:[#allocation3 + $0xc8] sm:$0xf]
    %v571 = vld [vmem:[#allocation3 + $0xcc] sm:$0xff]
    %v572 = vld [vmem:[#allocation3 + $0xd4] sm:$0xf]
    %v573 = vld [vmem:[#allocation3 + $0xd8] sm:$0xff]
    %v574 = vld [vmem:[#allocation3 + $0xe0] sm:$0xf]
    %v575 = vld [vmem:[#allocation3 + $0xe4] sm:$0xff]
    %v576 = vld [vmem:[#allocation3 + $0xec] sm:$0xf]
    %v577 = vld [vmem:[#allocation3 + $0xf0] sm:$0xff]
    %v578 = vld [vmem:[#allocation3 + $0xf8] sm:$0xf]
    %v579 = vld [vmem:[#allocation3 + $0xfc] sm:$0xff]
    %v580 = vld [vmem:[#allocation3 + $0x104] sm:$0xf]
    %v581 = vld [vmem:[#allocation3 + $0x108] sm:$0xff]
    %v582 = vld [vmem:[#allocation3 + $0x110] sm:$0xf]
    %v583 = vld [vmem:[#allocation3 + $0x114] sm:$0xff]
    %v584 = vld [vmem:[#allocation3 + $0x11c] sm:$0xf]
    %v585 = vld [vmem:[#allocation3 + $0x120] sm:$0xff]
    %v586 = vld [vmem:[#allocation3 + $0x128] sm:$0xf]
    %v587 = vld [vmem:[#allocation3 + $0x12c] sm:$0xff]
    %v588 = vld [vmem:[#allocation3 + $0x134] sm:$0xf]
    %v589 = vld [vmem:[#allocation3 + $0x138] sm:$0xff]
    %v590 = vld [vmem:[#allocation3 + $0x140] sm:$0xf]
    %v591 = vld [vmem:[#allocation3 + $0x144] sm:$0xff]
    %v592 = vld [vmem:[#allocation3 + $0x14c] sm:$0xf]
    %v593 = vld [vmem:[#allocation3 + $0x150] sm:$0xff]
    %v594 = vld [vmem:[#allocation3 + $0x158] sm:$0xf]
    %v595 = vld [vmem:[#allocation3 + $0x15c] sm:$0xff]
    %v596 = vld [vmem:[#allocation3 + $0x164] sm:$0xf]
    %v597 = vld [vmem:[#allocation3 + $0x168] sm:$0xff]
    %v598 = vld [vmem:[#allocation3 + $0x170] sm:$0xf]
    %v599 = vld [vmem:[#allocation3 + $0x174] sm:$0xff]
    %v600 = vld [vmem:[#allocation3 + $0x17c] sm:$0xf]
    %v601 = vld [vmem:[#allocation3 + $0x180] sm:$0xff]
    %v602 = vld [vmem:[#allocation3 + $0x188] sm:$0xf]
    %v603 = vld [vmem:[#allocation3 + $0x18c] sm:$0xff]
    %v604 = vld [vmem:[#allocation3 + $0x194] sm:$0xf]
    %v605 = vld [vmem:[#allocation3 + $0x198] sm:$0xff]
    %v606 = vld [vmem:[#allocation3 + $0x1a0] sm:$0xf]
    %v607 = vld [vmem:[#allocation3 + $0x1a4] sm:$0xff]
    %v608 = vld [vmem:[#allocation3 + $0x1ac] sm:$0xf]
    %v609 = vld [vmem:[#allocation3 + $0x1b0] sm:$0xff]
    %v610 = vld [vmem:[#allocation3 + $0x1b8] sm:$0xf]
    %v611 = vld [vmem:[#allocation3 + $0x1bc] sm:$0xff]
    %v612 = vld [vmem:[#allocation3 + $0x1c4] sm:$0xf]
    %v613 = vld [vmem:[#allocation3 + $0x1c8] sm:$0xff]
    %v614 = vld [vmem:[#allocation3 + $0x1d0] sm:$0xf]
    %v615 = vld [vmem:[#allocation3 + $0x1d4] sm:$0xff]
    %v616 = vld [vmem:[#allocation3 + $0x1dc] sm:$0xf]
    %v617 = vld [vmem:[#allocation3 + $0x1e0] sm:$0xff]
    %v618 = vld [vmem:[#allocation3 + $0x1e8] sm:$0xf]
    %v619 = vld [vmem:[#allocation3 + $0x1ec] sm:$0xff]
    %v620 = vld [vmem:[#allocation3 + $0x1f4] sm:$0xf]
    %v621 = vld [vmem:[#allocation3 + $0x1f8] sm:$0xff]
    %v622 = vld [vmem:[#allocation3 + $0x200] sm:$0xf]
    %v623 = vld [vmem:[#allocation3 + $0x204] sm:$0xff]
    %v624 = vld [vmem:[#allocation3 + $0x20c] sm:$0xf]
    %v625 = vld [vmem:[#allocation3 + $0x210] sm:$0xff]
    %v626 = vld [vmem:[#allocation3 + $0x218] sm:$0xf]
    %v627 = vld [vmem:[#allocation3 + $0x21c] sm:$0xff]
    %v628 = vld [vmem:[#allocation3 + $0x224] sm:$0xf]
    %v629 = vld [vmem:[#allocation3 + $0x228] sm:$0xff]
    %v630 = vld [vmem:[#allocation3 + $0x230] sm:$0xf]
    %v631 = vld [vmem:[#allocation3 + $0x234] sm:$0xff]
    %v632 = vld [vmem:[#allocation3 + $0x23c] sm:$0xf]
    %v633 = vld [vmem:[#allocation3 + $0x240] sm:$0xff]
    %v634 = vld [vmem:[#allocation3 + $0x248] sm:$0xf]
    %v635 = vld [vmem:[#allocation3 + $0x24c] sm:$0xff]
    %v636 = vld [vmem:[#allocation3 + $0x254] sm:$0xf]
    %v637 = vld [vmem:[#allocation3 + $0x258] sm:$0xff]
    %v638 = vld [vmem:[#allocation3 + $0x260] sm:$0xf]
    %v639 = vld [vmem:[#allocation3 + $0x264] sm:$0xff]
    %v640 = vld [vmem:[#allocation3 + $0x26c] sm:$0xf]
    %v641 = vld [vmem:[#allocation3 + $0x270] sm:$0xff]
    %v642 = vld [vmem:[#allocation3 + $0x278] sm:$0xf]
    %v643 = vld [vmem:[#allocation3 + $0x27c] sm:$0xff]
    %v644 = vld [vmem:[#allocation3 + $0x284] sm:$0xf]
    %v645 = vld [vmem:[#allocation3 + $0x288] sm:$0xff]
    %v646 = vld [vmem:[#allocation3 + $0x290] sm:$0xf]
    %v647 = vld [vmem:[#allocation3 + $0x294] sm:$0xff]
    %v648 = vld [vmem:[#allocation3 + $0x29c] sm:$0xf]
    %v649 = vld [vmem:[#allocation3 + $0x2a0] sm:$0xff]
    %v650 = vld [vmem:[#allocation3 + $0x2a8] sm:$0xf]
    %v651 = vld [vmem:[#allocation3 + $0x2ac] sm:$0xff]
    %v652 = vld [vmem:[#allocation3 + $0x2b4] sm:$0xf]
    %v653 = vld [vmem:[#allocation3 + $0x2b8] sm:$0xff]
    %v654 = vld [vmem:[#allocation3 + $0x2c0] sm:$0xf]
    %v655 = vld [vmem:[#allocation3 + $0x2c4] sm:$0xff]
    %v656 = vld [vmem:[#allocation3 + $0x2cc] sm:$0xf]
    %v657 = vld [vmem:[#allocation3 + $0x2d0] sm:$0xff]
    %v658 = vld [vmem:[#allocation3 + $0x2d8] sm:$0xf]
    %v659 = vld [vmem:[#allocation3 + $0x2dc] sm:$0xff]
    %v660 = vld [vmem:[#allocation3 + $0x2e4] sm:$0xf]
    %v661 = vld [vmem:[#allocation3 + $0x2e8] sm:$0xff]
    %v662 = vld [vmem:[#allocation3 + $0x2f0] sm:$0xf]
    %v663 = vld [vmem:[#allocation3 + $0x2f4] sm:$0xff]
    %v664 = vld [vmem:[#allocation3 + $0x2fc] sm:$0xf]
    %v665 = vld [vmem:[%s4] sm:$0x7]
    %v667 = vlaneseq
    %v668 = vshrl.u32 %v667, 7
    %v669 = vsub.s32 0, %v668
    %v670 = vrot.slane %v665, %v669
    %v671 = vlaneseq
    %v672 = vshrl.u32 %v671, 7
    %v673 = vsub.s32 1, %v672
    %v674 = vrot.slane %v665, %v673
    %v675 = vlaneseq
    %v676 = vshrl.u32 %v675, 7
    %v677 = vsub.s32 2, %v676
    %v678 = vrot.slane %v665, %v677
    %v810 = vunpack.c.l.b16 %v537
    %v811 = vunpack.c.h.b16 %v537
    %v812 = vunpack.c.l.b16 %v538
    %v813 = vunpack.c.l.b16 %v539
    %v814 = vunpack.c.h.b16 %v539
    %v815 = vunpack.c.l.b16 %v540
    %v816 = vunpack.c.l.b16 %v541
    %v817 = vunpack.c.h.b16 %v541
    %v818 = vunpack.c.l.b16 %v542
    %v819 = vunpack.c.l.b16 %v543
    %v820 = vunpack.c.h.b16 %v543
    %v821 = vunpack.c.l.b16 %v544
    %v822 = vunpack.c.l.b16 %v545
    %v823 = vunpack.c.h.b16 %v545
    %v824 = vunpack.c.l.b16 %v546
    %v825 = vunpack.c.l.b16 %v547
    %v826 = vunpack.c.h.b16 %v547
    %v827 = vunpack.c.l.b16 %v548
    %v828 = vunpack.c.l.b16 %v549
    %v829 = vunpack.c.h.b16 %v549
    %v830 = vunpack.c.l.b16 %v550
    %v831 = vunpack.c.l.b16 %v551
    %v832 = vunpack.c.h.b16 %v551
    %v833 = vunpack.c.l.b16 %v552
    %v834 = vunpack.c.l.b16 %v553
    %v835 = vunpack.c.h.b16 %v553
    %v836 = vunpack.c.l.b16 %v554
    %v837 = vunpack.c.l.b16 %v555
    %v838 = vunpack.c.h.b16 %v555
    %v839 = vunpack.c.l.b16 %v556
    %v840 = vunpack.c.l.b16 %v557
    %v841 = vunpack.c.h.b16 %v557
    %v842 = vunpack.c.l.b16 %v558
    %v843 = vunpack.c.l.b16 %v559
    %v844 = vunpack.c.h.b16 %v559
    %v845 = vunpack.c.l.b16 %v560
    %v846 = vunpack.c.l.b16 %v561
    %v847 = vunpack.c.h.b16 %v561
    %v848 = vunpack.c.l.b16 %v562
    %v849 = vunpack.c.l.b16 %v563
    %v850 = vunpack.c.h.b16 %v563
    %v851 = vunpack.c.l.b16 %v564
    %v852 = vunpack.c.l.b16 %v565
    %v853 = vunpack.c.h.b16 %v565
    %v854 = vunpack.c.l.b16 %v566
    %v855 = vunpack.c.l.b16 %v567
    %v856 = vunpack.c.h.b16 %v567
    %v857 = vunpack.c.l.b16 %v568
    %v858 = vunpack.c.l.b16 %v569
    %v859 = vunpack.c.h.b16 %v569
    %v860 = vunpack.c.l.b16 %v570
    %v861 = vunpack.c.l.b16 %v571
    %v862 = vunpack.c.h.b16 %v571
    %v863 = vunpack.c.l.b16 %v572
    %v864 = vunpack.c.l.b16 %v573
    %v865 = vunpack.c.h.b16 %v573
    %v866 = vunpack.c.l.b16 %v574
    %v867 = vunpack.c.l.b16 %v575
    %v868 = vunpack.c.h.b16 %v575
    %v869 = vunpack.c.l.b16 %v576
    %v870 = vunpack.c.l.b16 %v577
    %v871 = vunpack.c.h.b16 %v577
    %v872 = vunpack.c.l.b16 %v578
    %v873 = vunpack.c.l.b16 %v579
    %v874 = vunpack.c.h.b16 %v579
    %v875 = vunpack.c.l.b16 %v580
    %v876 = vunpack.c.l.b16 %v581
    %v877 = vunpack.c.h.b16 %v581
    %v878 = vunpack.c.l.b16 %v582
    %v879 = vunpack.c.l.b16 %v583
    %v880 = vunpack.c.h.b16 %v583
    %v881 = vunpack.c.l.b16 %v584
    %v882 = vunpack.c.l.b16 %v585
    %v883 = vunpack.c.h.b16 %v585
    %v884 = vunpack.c.l.b16 %v586
    %v885 = vunpack.c.l.b16 %v587
    %v886 = vunpack.c.h.b16 %v587
    %v887 = vunpack.c.l.b16 %v588
    %v888 = vunpack.c.l.b16 %v589
    %v889 = vunpack.c.h.b16 %v589
    %v890 = vunpack.c.l.b16 %v590
    %v891 = vunpack.c.l.b16 %v591
    %v892 = vunpack.c.h.b16 %v591
    %v893 = vunpack.c.l.b16 %v592
    %v894 = vunpack.c.l.b16 %v593
    %v895 = vunpack.c.h.b16 %v593
    %v896 = vunpack.c.l.b16 %v594
    %v897 = vunpack.c.l.b16 %v595
    %v898 = vunpack.c.h.b16 %v595
    %v899 = vunpack.c.l.b16 %v596
    %v900 = vunpack.c.l.b16 %v597
    %v901 = vunpack.c.h.b16 %v597
    %v902 = vunpack.c.l.b16 %v598
    %v903 = vunpack.c.l.b16 %v599
    %v904 = vunpack.c.h.b16 %v599
    %v905 = vunpack.c.l.b16 %v600
    %v906 = vunpack.c.l.b16 %v601
    %v907 = vunpack.c.h.b16 %v601
    %v908 = vunpack.c.l.b16 %v602
    %v909 = vunpack.c.l.b16 %v603
    %v910 = vunpack.c.h.b16 %v603
    %v911 = vunpack.c.l.b16 %v604
    %v912 = vunpack.c.l.b16 %v605
    %v913 = vunpack.c.h.b16 %v605
    %v914 = vunpack.c.l.b16 %v606
    %v915 = vunpack.c.l.b16 %v607
    %v916 = vunpack.c.h.b16 %v607
    %v917 = vunpack.c.l.b16 %v608
    %v918 = vunpack.c.l.b16 %v609
    %v919 = vunpack.c.h.b16 %v609
    %v920 = vunpack.c.l.b16 %v610
    %v921 = vunpack.c.l.b16 %v611
    %v922 = vunpack.c.h.b16 %v611
    %v923 = vunpack.c.l.b16 %v612
    %v924 = vunpack.c.l.b16 %v613
    %v925 = vunpack.c.h.b16 %v613
    %v926 = vunpack.c.l.b16 %v614
    %v927 = vunpack.c.l.b16 %v615
    %v928 = vunpack.c.h.b16 %v615
    %v929 = vunpack.c.l.b16 %v616
    %v930 = vunpack.c.l.b16 %v617
    %v931 = vunpack.c.h.b16 %v617
    %v932 = vunpack.c.l.b16 %v618
    %v933 = vunpack.c.l.b16 %v619
    %v934 = vunpack.c.h.b16 %v619
    %v935 = vunpack.c.l.b16 %v620
    %v936 = vunpack.c.l.b16 %v621
    %v937 = vunpack.c.h.b16 %v621
    %v938 = vunpack.c.l.b16 %v622
    %v939 = vunpack.c.l.b16 %v623
    %v940 = vunpack.c.h.b16 %v623
    %v941 = vunpack.c.l.b16 %v624
    %v942 = vunpack.c.l.b16 %v625
    %v943 = vunpack.c.h.b16 %v625
    %v944 = vunpack.c.l.b16 %v626
    %v945 = vunpack.c.l.b16 %v627
    %v946 = vunpack.c.h.b16 %v627
    %v947 = vunpack.c.l.b16 %v628
    %v948 = vunpack.c.l.b16 %v629
    %v949 = vunpack.c.h.b16 %v629
    %v950 = vunpack.c.l.b16 %v630
    %v951 = vunpack.c.l.b16 %v631
    %v952 = vunpack.c.h.b16 %v631
    %v953 = vunpack.c.l.b16 %v632
    %v954 = vunpack.c.l.b16 %v633
    %v955 = vunpack.c.h.b16 %v633
    %v956 = vunpack.c.l.b16 %v634
    %v957 = vunpack.c.l.b16 %v635
    %v958 = vunpack.c.h.b16 %v635
    %v959 = vunpack.c.l.b16 %v636
    %v960 = vunpack.c.l.b16 %v637
    %v961 = vunpack.c.h.b16 %v637
    %v962 = vunpack.c.l.b16 %v638
    %v963 = vunpack.c.l.b16 %v639
    %v964 = vunpack.c.h.b16 %v639
    %v965 = vunpack.c.l.b16 %v640
    %v966 = vunpack.c.l.b16 %v641
    %v967 = vunpack.c.h.b16 %v641
    %v968 = vunpack.c.l.b16 %v642
    %v969 = vunpack.c.l.b16 %v643
    %v970 = vunpack.c.h.b16 %v643
    %v971 = vunpack.c.l.b16 %v644
    %v972 = vunpack.c.l.b16 %v645
    %v973 = vunpack.c.h.b16 %v645
    %v974 = vunpack.c.l.b16 %v646
    %v975 = vunpack.c.l.b16 %v647
    %v976 = vunpack.c.h.b16 %v647
    %v977 = vunpack.c.l.b16 %v648
    %v978 = vunpack.c.l.b16 %v649
    %v979 = vunpack.c.h.b16 %v649
    %v980 = vunpack.c.l.b16 %v650
    %v981 = vunpack.c.l.b16 %v651
    %v982 = vunpack.c.h.b16 %v651
    %v983 = vunpack.c.l.b16 %v652
    %v984 = vunpack.c.l.b16 %v653
    %v985 = vunpack.c.h.b16 %v653
    %v986 = vunpack.c.l.b16 %v654
    %v987 = vunpack.c.l.b16 %v655
    %v988 = vunpack.c.h.b16 %v655
    %v989 = vunpack.c.l.b16 %v656
    %v990 = vunpack.c.l.b16 %v657
    %v991 = vunpack.c.h.b16 %v657
    %v992 = vunpack.c.l.b16 %v658
    %v993 = vunpack.c.l.b16 %v659
    %v994 = vunpack.c.h.b16 %v659
    %v995 = vunpack.c.l.b16 %v660
    %v996 = vunpack.c.l.b16 %v661
    %v997 = vunpack.c.h.b16 %v661
    %v998 = vunpack.c.l.b16 %v662
    %v999 = vunpack.c.l.b16 %v663
    %v1000 = vunpack.c.h.b16 %v663
    %v1001 = vunpack.c.l.b16 %v664
    %v1002 = vpack.c.b16 %v813, %v810
    %v1003 = vpack.c.b16 %v814, %v811
    %v1004 = vpack.c.b16 %v815, %v812
    %v1005 = vpack.c.b16 %v819, %v816
    %v1006 = vpack.c.b16 %v820, %v817
    %v1007 = vpack.c.b16 %v821, %v818
    %v1008 = vpack.c.b16 %v825, %v822
    %v1009 = vpack.c.b16 %v826, %v823
    %v1010 = vpack.c.b16 %v827, %v824
    %v1011 = vpack.c.b16 %v831, %v828
    %v1012 = vpack.c.b16 %v832, %v829
    %v1013 = vpack.c.b16 %v833, %v830
    %v1014 = vpack.c.b16 %v837, %v834
    %v1015 = vpack.c.b16 %v838, %v835
    %v1016 = vpack.c.b16 %v839, %v836
    %v1017 = vpack.c.b16 %v843, %v840
    %v1018 = vpack.c.b16 %v844, %v841
    %v1019 = vpack.c.b16 %v845, %v842
    %v1020 = vpack.c.b16 %v849, %v846
    %v1021 = vpack.c.b16 %v850, %v847
    %v1022 = vpack.c.b16 %v851, %v848
    %v1023 = vpack.c.b16 %v855, %v852
    %v1024 = vpack.c.b16 %v856, %v853
    %v1025 = vpack.c.b16 %v857, %v854
    %v1026 = vpack.c.b16 %v861, %v858
    %v1027 = vpack.c.b16 %v862, %v859
    %v1028 = vpack.c.b16 %v863, %v860
    %v1029 = vpack.c.b16 %v867, %v864
    %v1030 = vpack.c.b16 %v868, %v865
    %v1031 = vpack.c.b16 %v869, %v866
    %v1032 = vpack.c.b16 %v873, %v870
    %v1033 = vpack.c.b16 %v874, %v871
    %v1034 = vpack.c.b16 %v875, %v872
    %v1035 = vpack.c.b16 %v879, %v876
    %v1036 = vpack.c.b16 %v880, %v877
    %v1037 = vpack.c.b16 %v881, %v878
    %v1038 = vpack.c.b16 %v885, %v882
    %v1039 = vpack.c.b16 %v886, %v883
    %v1040 = vpack.c.b16 %v887, %v884
    %v1041 = vpack.c.b16 %v891, %v888
    %v1042 = vpack.c.b16 %v892, %v889
    %v1043 = vpack.c.b16 %v893, %v890
    %v1044 = vpack.c.b16 %v897, %v894
    %v1045 = vpack.c.b16 %v898, %v895
    %v1046 = vpack.c.b16 %v899, %v896
    %v1047 = vpack.c.b16 %v903, %v900
    %v1048 = vpack.c.b16 %v904, %v901
    %v1049 = vpack.c.b16 %v905, %v902
    %v1050 = vpack.c.b16 %v909, %v906
    %v1051 = vpack.c.b16 %v910, %v907
    %v1052 = vpack.c.b16 %v911, %v908
    %v1053 = vpack.c.b16 %v915, %v912
    %v1054 = vpack.c.b16 %v916, %v913
    %v1055 = vpack.c.b16 %v917, %v914
    %v1056 = vpack.c.b16 %v921, %v918
    %v1057 = vpack.c.b16 %v922, %v919
    %v1058 = vpack.c.b16 %v923, %v920
    %v1059 = vpack.c.b16 %v927, %v924
    %v1060 = vpack.c.b16 %v928, %v925
    %v1061 = vpack.c.b16 %v929, %v926
    %v1062 = vpack.c.b16 %v933, %v930
    %v1063 = vpack.c.b16 %v934, %v931
    %v1064 = vpack.c.b16 %v935, %v932
    %v1065 = vpack.c.b16 %v939, %v936
    %v1066 = vpack.c.b16 %v940, %v937
    %v1067 = vpack.c.b16 %v941, %v938
    %v1068 = vpack.c.b16 %v945, %v942
    %v1069 = vpack.c.b16 %v946, %v943
    %v1070 = vpack.c.b16 %v947, %v944
    %v1071 = vpack.c.b16 %v951, %v948
    %v1072 = vpack.c.b16 %v952, %v949
    %v1073 = vpack.c.b16 %v953, %v950
    %v1074 = vpack.c.b16 %v957, %v954
    %v1075 = vpack.c.b16 %v958, %v955
    %v1076 = vpack.c.b16 %v959, %v956
    %v1077 = vpack.c.b16 %v963, %v960
    %v1078 = vpack.c.b16 %v964, %v961
    %v1079 = vpack.c.b16 %v965, %v962
    %v1080 = vpack.c.b16 %v969, %v966
    %v1081 = vpack.c.b16 %v970, %v967
    %v1082 = vpack.c.b16 %v971, %v968
    %v1083 = vpack.c.b16 %v975, %v972
    %v1084 = vpack.c.b16 %v976, %v973
    %v1085 = vpack.c.b16 %v977, %v974
    %v1086 = vpack.c.b16 %v981, %v978
    %v1087 = vpack.c.b16 %v982, %v979
    %v1088 = vpack.c.b16 %v983, %v980
    %v1089 = vpack.c.b16 %v987, %v984
    %v1090 = vpack.c.b16 %v988, %v985
    %v1091 = vpack.c.b16 %v989, %v986
    %v1092 = vpack.c.b16 %v993, %v990
    %v1093 = vpack.c.b16 %v994, %v991
    %v1094 = vpack.c.b16 %v995, %v992
    %v1095 = vpack.c.b16 %v999, %v996
    %v1096 = vpack.c.b16 %v1000, %v997
    %v1097 = vpack.c.b16 %v1001, %v998
    %1194 = vmatprep.subr.bf16.mxu0 %v1003
    %1195 = vmatpush1.bf16.msra.mxu0 %v1002
    %1196 = vmatprep.subr.bf16.mxu0 %v1006
    %1197 = vmatpush1.bf16.msra.mxu0 %v1005
    %1198 = vmatprep.subr.bf16.mxu0 %v1009
    %1199 = vmatpush1.bf16.msra.mxu0 %v1008
    %1200 = vmatprep.subr.bf16.mxu0 %v1012
    %1201 = vmatpush1.bf16.msra.mxu0 %v1011
    %1202 = vmatprep.subr.bf16.mxu0 %v1015
    %1203 = vmatpush1.bf16.msra.mxu0 %v1014
    %1204 = vmatprep.subr.bf16.mxu0 %v1018
    %1205 = vmatpush1.bf16.msra.mxu0 %v1017
    %1206 = vmatprep.subr.bf16.mxu0 %v1021
    %1207 = vmatpush1.bf16.msra.mxu0 %v1020
    %1208 = vmatprep.subr.bf16.mxu0 %v1024
    %1209 = vmatpush1.bf16.msra.mxu0 %v1023
    %1210 = vmatprep.subr.bf16.mxu0 %v1027
    %1211 = vmatpush1.bf16.msra.mxu0 %v1026
    %1212 = vmatprep.subr.bf16.mxu0 %v1030
    %1213 = vmatpush1.bf16.msra.mxu0 %v1029
    %1214 = vmatprep.subr.bf16.mxu0 %v1033
    %1215 = vmatpush1.bf16.msra.mxu0 %v1032
    %1216 = vmatprep.subr.bf16.mxu0 %v1036
    %1217 = vmatpush1.bf16.msra.mxu0 %v1035
    %1218 = vmatprep.subr.bf16.mxu0 %v1039
    %1219 = vmatpush1.bf16.msra.mxu0 %v1038
    %1220 = vmatprep.subr.bf16.mxu0 %v1042
    %1221 = vmatpush1.bf16.msra.mxu0 %v1041
    %1222 = vmatprep.subr.bf16.mxu0 %v1045
    %1223 = vmatpush1.bf16.msra.mxu0 %v1044
    %1224 = vmatprep.subr.bf16.mxu0 %v1048
    %1225 = vmatpush1.bf16.msra.mxu0 %v1047
    %1226 = vmatprep.mubr.bf16.mxu0 %v506
    %1227 = vmatmul.mubr.bf16.gmra.mrb[0].mxu0 %v505
    %v1228 = vpop.f32.mrb[0].mxu0
    %v1229 = vadd.f32 %v670, %v1228
    %v1230 = vpop.f32.mrb[0].mxu0
    %v1231 = vadd.f32 %v674, %v1230
    %v1232 = vpop.f32.mrb[0].mxu0
    %v1233 = vadd.f32 %v670, %v1232
    %v1234 = vpop.f32.mrb[0].mxu0
    %v1235 = vadd.f32 %v674, %v1234
    %1236 = vmatprep.mubr.bf16.mxu0 %v510
    %1237 = vmatmul.mubr.bf16.gmra.mrb[0].mxu0 %v509
    %v1238 = vpop.f32.mrb[0].mxu0
    %v1239 = vadd.f32 %v670, %v1238
    %v1240 = vpop.f32.mrb[0].mxu0
    %v1241 = vadd.f32 %v674, %v1240
    %v1242 = vpop.f32.mrb[0].mxu0
    %v1243 = vadd.f32 %v670, %v1242
    %v1244 = vpop.f32.mrb[0].mxu0
    %v1245 = vadd.f32 %v674, %v1244
    %1246 = vmatprep.mubr.bf16.mxu0 %v514
    %1247 = vmatmul.mubr.bf16.gmra.mrb[0].mxu0 %v513
    %v1248 = vpop.f32.mrb[0].mxu0
    %v1249 = vadd.f32 %v670, %v1248
    %v1250 = vpop.f32.mrb[0].mxu0
    %v1251 = vadd.f32 %v674, %v1250
    %v1252 = vpop.f32.mrb[0].mxu0
    %v1253 = vadd.f32 %v670, %v1252
    %v1254 = vpop.f32.mrb[0].mxu0
    %v1255 = vadd.f32 %v674, %v1254
    %1256 = vmatprep.mubr.bf16.mxu0 %v518
    %1257 = vmatmul.mubr.bf16.gmra.mrb[0].mxu0 %v517
    %v1258 = vpop.f32.mrb[0].mxu0
    %v1259 = vadd.f32 %v670, %v1258
    %v1260 = vpop.f32.mrb[0].mxu0
    %v1261 = vadd.f32 %v674, %v1260
    %v1262 = vpop.f32.mrb[0].mxu0
    %v1263 = vadd.f32 %v670, %v1262
    %v1264 = vpop.f32.mrb[0].mxu0
    %v1265 = vadd.f32 %v674, %v1264
    %1266 = vmatprep.mubr.bf16.mxu0 %v522
    %1267 = vmatmul.mubr.bf16.gmra.mrb[0].mxu0 %v521
    %v1268 = vpop.f32.mrb[0].mxu0
    %v1269 = vadd.f32 %v670, %v1268
    %v1270 = vpop.f32.mrb[0].mxu0
    %v1271 = vadd.f32 %v674, %v1270
    %v1272 = vpop.f32.mrb[0].mxu0
    %v1273 = vadd.f32 %v670, %v1272
    %v1274 = vpop.f32.mrb[0].mxu0
    %v1275 = vadd.f32 %v674, %v1274
    %1276 = vmatprep.mubr.bf16.mxu0 %v526
    %1277 = vmatmul.mubr.bf16.gmra.mrb[0].mxu0 %v525
    %v1278 = vpop.f32.mrb[0].mxu0
    %v1279 = vadd.f32 %v670, %v1278
    %v1280 = vpop.f32.mrb[0].mxu0
    %v1281 = vadd.f32 %v674, %v1280
    %v1282 = vpop.f32.mrb[0].mxu0
    %v1283 = vadd.f32 %v670, %v1282
    %v1284 = vpop.f32.mrb[0].mxu0
    %v1285 = vadd.f32 %v674, %v1284
    %1286 = vmatprep.mubr.bf16.mxu0 %v530
    %1287 = vmatmul.mubr.bf16.gmra.mrb[0].mxu0 %v529
    %v1288 = vpop.f32.mrb[0].mxu0
    %v1289 = vadd.f32 %v670, %v1288
    %v1290 = vpop.f32.mrb[0].mxu0
    %v1291 = vadd.f32 %v674, %v1290
    %v1292 = vpop.f32.mrb[0].mxu0
    %v1293 = vadd.f32 %v670, %v1292
    %v1294 = vpop.f32.mrb[0].mxu0
    %v1295 = vadd.f32 %v674, %v1294
    %1296 = vmatprep.mubr.bf16.mxu0 %v534
    %1297 = vmatmul.mubr.bf16.gmra.mrb[0].mxu0 %v533
    %v1298 = vpop.f32.mrb[0].mxu0
    %v1299 = vadd.f32 %v670, %v1298
    %v1300 = vpop.f32.mrb[0].mxu0
    %v1301 = vadd.f32 %v674, %v1300
    %v1302 = vpop.f32.mrb[0].mxu0
    %v1303 = vadd.f32 %v670, %v1302
    %v1304 = vpop.f32.mrb[0].mxu0
    %v1305 = vadd.f32 %v674, %v1304
    %1306 = vdwg.mxu0
    %1307 = vmatprep.subr.bf16.mxu0 %v1051
    %1308 = vmatpush1.bf16.msra.mxu0 %v1050
    %1309 = vmatprep.subr.bf16.mxu0 %v1054
    %1310 = vmatpush1.bf16.msra.mxu0 %v1053
    %1311 = vmatprep.subr.bf16.mxu0 %v1057
    %1312 = vmatpush1.bf16.msra.mxu0 %v1056
    %1313 = vmatprep.subr.bf16.mxu0 %v1060
    %1314 = vmatpush1.bf16.msra.mxu0 %v1059
    %1315 = vmatprep.subr.bf16.mxu0 %v1063
    %1316 = vmatpush1.bf16.msra.mxu0 %v1062
    %1317 = vmatprep.subr.bf16.mxu0 %v1066
    %1318 = vmatpush1.bf16.msra.mxu0 %v1065
    %1319 = vmatprep.subr.bf16.mxu0 %v1069
    %1320 = vmatpush1.bf16.msra.mxu0 %v1068
    %1321 = vmatprep.subr.bf16.mxu0 %v1072
    %1322 = vmatpush1.bf16.msra.mxu0 %v1071
    %1323 = vmatprep.subr.bf16.mxu0 %v1075
    %1324 = vmatpush1.bf16.msra.mxu0 %v1074
    %1325 = vmatprep.subr.bf16.mxu0 %v1078
    %1326 = vmatpush1.bf16.msra.mxu0 %v1077
    %1327 = vmatprep.subr.bf16.mxu0 %v1081
    %1328 = vmatpush1.bf16.msra.mxu0 %v1080
    %1329 = vmatprep.subr.bf16.mxu0 %v1084
    %1330 = vmatpush1.bf16.msra.mxu0 %v1083
    %1331 = vmatprep.subr.bf16.mxu0 %v1087
    %1332 = vmatpush1.bf16.msra.mxu0 %v1086
    %1333 = vmatprep.subr.bf16.mxu0 %v1090
    %1334 = vmatpush1.bf16.msra.mxu0 %v1089
    %1335 = vmatprep.subr.bf16.mxu0 %v1093
    %1336 = vmatpush1.bf16.msra.mxu0 %v1092
    %1337 = vmatprep.subr.bf16.mxu0 %v1096
    %1338 = vmatpush1.bf16.msra.mxu0 %v1095
    %1339 = vmatprep.mubr.bf16.mxu0 %v508
    %1340 = vmatmul.mubr.bf16.gmra.mrb[0].mxu0 %v507
    %v1341 = vpop.f32.mrb[0].mxu0
    %v1342 = vadd.f32 %v1229, %v1341
    %v1343 = vpop.f32.mrb[0].mxu0
    %v1344 = vadd.f32 %v1231, %v1343
    %v1345 = vpop.f32.mrb[0].mxu0
    %v1346 = vadd.f32 %v1233, %v1345
    %v1347 = vpop.f32.mrb[0].mxu0
    %v1348 = vadd.f32 %v1235, %v1347
    %1349 = vmatprep.mubr.bf16.mxu0 %v512
    %1350 = vmatmul.mubr.bf16.gmra.mrb[0].mxu0 %v511
    %v1351 = vpop.f32.mrb[0].mxu0
    %v1352 = vadd.f32 %v1239, %v1351
    %v1353 = vpop.f32.mrb[0].mxu0
    %v1354 = vadd.f32 %v1241, %v1353
    %v1355 = vpop.f32.mrb[0].mxu0
    %v1356 = vadd.f32 %v1243, %v1355
    %v1357 = vpop.f32.mrb[0].mxu0
    %v1358 = vadd.f32 %v1245, %v1357
    %1359 = vmatprep.mubr.bf16.mxu0 %v516
    %1360 = vmatmul.mubr.bf16.gmra.mrb[0].mxu0 %v515
    %v1361 = vpop.f32.mrb[0].mxu0
    %v1362 = vadd.f32 %v1249, %v1361
    %v1363 = vpop.f32.mrb[0].mxu0
    %v1364 = vadd.f32 %v1251, %v1363
    %v1365 = vpop.f32.mrb[0].mxu0
    %v1366 = vadd.f32 %v1253, %v1365
    %v1367 = vpop.f32.mrb[0].mxu0
    %v1368 = vadd.f32 %v1255, %v1367
    %1369 = vmatprep.mubr.bf16.mxu0 %v520
    %1370 = vmatmul.mubr.bf16.gmra.mrb[0].mxu0 %v519
    %v1371 = vpop.f32.mrb[0].mxu0
    %v1372 = vadd.f32 %v1259, %v1371
    %v1373 = vpop.f32.mrb[0].mxu0
    %v1374 = vadd.f32 %v1261, %v1373
    %v1375 = vpop.f32.mrb[0].mxu0
    %v1376 = vadd.f32 %v1263, %v1375
    %v1377 = vpop.f32.mrb[0].mxu0
    %v1378 = vadd.f32 %v1265, %v1377
    %1379 = vmatprep.mubr.bf16.mxu0 %v524
    %1380 = vmatmul.mubr.bf16.gmra.mrb[0].mxu0 %v523
    %v1381 = vpop.f32.mrb[0].mxu0
    %v1382 = vadd.f32 %v1269, %v1381
    %v1383 = vpop.f32.mrb[0].mxu0
    %v1384 = vadd.f32 %v1271, %v1383
    %v1385 = vpop.f32.mrb[0].mxu0
    %v1386 = vadd.f32 %v1273, %v1385
    %v1387 = vpop.f32.mrb[0].mxu0
    %v1388 = vadd.f32 %v1275, %v1387
    %1389 = vmatprep.mubr.bf16.mxu0 %v528
    %1390 = vmatmul.mubr.bf16.gmra.mrb[0].mxu0 %v527
    %v1391 = vpop.f32.mrb[0].mxu0
    %v1392 = vadd.f32 %v1279, %v1391
    %v1393 = vpop.f32.mrb[0].mxu0
    %v1394 = vadd.f32 %v1281, %v1393
    %v1395 = vpop.f32.mrb[0].mxu0
    %v1396 = vadd.f32 %v1283, %v1395
    %v1397 = vpop.f32.mrb[0].mxu0
    %v1398 = vadd.f32 %v1285, %v1397
    %1399 = vmatprep.mubr.bf16.mxu0 %v532
    %1400 = vmatmul.mubr.bf16.gmra.mrb[0].mxu0 %v531
    %v1401 = vpop.f32.mrb[0].mxu0
    %v1402 = vadd.f32 %v1289, %v1401
    %v1403 = vpop.f32.mrb[0].mxu0
    %v1404 = vadd.f32 %v1291, %v1403
    %v1405 = vpop.f32.mrb[0].mxu0
    %v1406 = vadd.f32 %v1293, %v1405
    %v1407 = vpop.f32.mrb[0].mxu0
    %v1408 = vadd.f32 %v1295, %v1407
    %1409 = vmatprep.mubr.bf16.mxu0 %v536
    %1410 = vmatmul.mubr.bf16.gmra.mrb[0].mxu0 %v535
    %v1411 = vpop.f32.mrb[0].mxu0
    %v1412 = vadd.f32 %v1299, %v1411
    %v1413 = vpop.f32.mrb[0].mxu0
    %v1414 = vadd.f32 %v1301, %v1413
    %v1415 = vpop.f32.mrb[0].mxu0
    %v1416 = vadd.f32 %v1303, %v1415
    %v1417 = vpop.f32.mrb[0].mxu0
    %v1418 = vadd.f32 %v1305, %v1417
    %1419 = vdwg.mxu0
    %1420 = vmatprep.subr.bf16.mxu0 0
    %1421 = vmatpush1.bf16.msra.mxu0 %v1004
    %1422 = vmatprep.subr.bf16.mxu0 0
    %1423 = vmatpush1.bf16.msra.mxu0 %v1007
    %1424 = vmatprep.subr.bf16.mxu0 0
    %1425 = vmatpush1.bf16.msra.mxu0 %v1010
    %1426 = vmatprep.subr.bf16.mxu0 0
    %1427 = vmatpush1.bf16.msra.mxu0 %v1013
    %1428 = vmatprep.subr.bf16.mxu0 0
    %1429 = vmatpush1.bf16.msra.mxu0 %v1016
    %1430 = vmatprep.subr.bf16.mxu0 0
    %1431 = vmatpush1.bf16.msra.mxu0 %v1019
    %1432 = vmatprep.subr.bf16.mxu0 0
    %1433 = vmatpush1.bf16.msra.mxu0 %v1022
    %1434 = vmatprep.subr.bf16.mxu0 0
    %1435 = vmatpush1.bf16.msra.mxu0 %v1025
    %1436 = vmatprep.subr.bf16.mxu0 0
    %1437 = vmatpush1.bf16.msra.mxu0 %v1028
    %1438 = vmatprep.subr.bf16.mxu0 0
    %1439 = vmatpush1.bf16.msra.mxu0 %v1031
    %1440 = vmatprep.subr.bf16.mxu0 0
    %1441 = vmatpush1.bf16.msra.mxu0 %v1034
    %1442 = vmatprep.subr.bf16.mxu0 0
    %1443 = vmatpush1.bf16.msra.mxu0 %v1037
    %1444 = vmatprep.subr.bf16.mxu0 0
    %1445 = vmatpush1.bf16.msra.mxu0 %v1040
    %1446 = vmatprep.subr.bf16.mxu0 0
    %1447 = vmatpush1.bf16.msra.mxu0 %v1043
    %1448 = vmatprep.subr.bf16.mxu0 0
    %1449 = vmatpush1.bf16.msra.mxu0 %v1046
    %1450 = vmatprep.subr.bf16.mxu0 0
    %1451 = vmatpush1.bf16.msra.mxu0 %v1049
    %1452 = vmatprep.mubr.bf16.mxu0 %v506
    %1453 = vmatmul.mubr.bf16.gmra.mrb[0].mxu0 %v505
    %v1454 = vpop.f32.mrb[0].mxu0
    %v1455 = vadd.f32 %v678, %v1454
    %v1456 = vpop.f32.mrb[0].mxu0
    %v1457 = vpop.f32.mrb[0].mxu0
    %v1458 = vadd.f32 %v678, %v1457
    %v1459 = vpop.f32.mrb[0].mxu0
    %1460 = vmatprep.mubr.bf16.mxu0 %v510
    %1461 = vmatmul.mubr.bf16.gmra.mrb[0].mxu0 %v509
    %v1462 = vpop.f32.mrb[0].mxu0
    %v1463 = vadd.f32 %v678, %v1462
    %v1464 = vpop.f32.mrb[0].mxu0
    %v1465 = vpop.f32.mrb[0].mxu0
    %v1466 = vadd.f32 %v678, %v1465
    %v1467 = vpop.f32.mrb[0].mxu0
    %1468 = vmatprep.mubr.bf16.mxu0 %v514
    %1469 = vmatmul.mubr.bf16.gmra.mrb[0].mxu0 %v513
    %v1470 = vpop.f32.mrb[0].mxu0
    %v1471 = vadd.f32 %v678, %v1470
    %v1472 = vpop.f32.mrb[0].mxu0
    %v1473 = vpop.f32.mrb[0].mxu0
    %v1474 = vadd.f32 %v678, %v1473
    %v1475 = vpop.f32.mrb[0].mxu0
    %1476 = vmatprep.mubr.bf16.mxu0 %v518
    %1477 = vmatmul.mubr.bf16.gmra.mrb[0].mxu0 %v517
    %v1478 = vpop.f32.mrb[0].mxu0
    %v1479 = vadd.f32 %v678, %v1478
    %v1480 = vpop.f32.mrb[0].mxu0
    %v1481 = vpop.f32.mrb[0].mxu0
    %v1482 = vadd.f32 %v678, %v1481
    %v1483 = vpop.f32.mrb[0].mxu0
    %1484 = vmatprep.mubr.bf16.mxu0 %v522
    %1485 = vmatmul.mubr.bf16.gmra.mrb[0].mxu0 %v521
    %v1486 = vpop.f32.mrb[0].mxu0
    %v1487 = vadd.f32 %v678, %v1486
    %v1488 = vpop.f32.mrb[0].mxu0
    %v1489 = vpop.f32.mrb[0].mxu0
    %v1490 = vadd.f32 %v678, %v1489
    %v1491 = vpop.f32.mrb[0].mxu0
    %1492 = vmatprep.mubr.bf16.mxu0 %v526
    %1493 = vmatmul.mubr.bf16.gmra.mrb[0].mxu0 %v525
    %v1494 = vpop.f32.mrb[0].mxu0
    %v1495 = vadd.f32 %v678, %v1494
    %v1496 = vpop.f32.mrb[0].mxu0
    %v1497 = vpop.f32.mrb[0].mxu0
    %v1498 = vadd.f32 %v678, %v1497
    %v1499 = vpop.f32.mrb[0].mxu0
    %1500 = vmatprep.mubr.bf16.mxu0 %v530
    %1501 = vmatmul.mubr.bf16.gmra.mrb[0].mxu0 %v529
    %v1502 = vpop.f32.mrb[0].mxu0
    %v1503 = vadd.f32 %v678, %v1502
    %v1504 = vpop.f32.mrb[0].mxu0
    %v1505 = vpop.f32.mrb[0].mxu0
    %v1506 = vadd.f32 %v678, %v1505
    %v1507 = vpop.f32.mrb[0].mxu0
    %1508 = vmatprep.mubr.bf16.mxu0 %v534
    %1509 = vmatmul.mubr.bf16.gmra.mrb[0].mxu0 %v533
    %v1510 = vpop.f32.mrb[0].mxu0
    %v1511 = vadd.f32 %v678, %v1510
    %v1512 = vpop.f32.mrb[0].mxu0
    %v1513 = vpop.f32.mrb[0].mxu0
    %v1514 = vadd.f32 %v678, %v1513
    %v1515 = vpop.f32.mrb[0].mxu0
    %1516 = vdwg.mxu0
    %1517 = vmatprep.subr.bf16.mxu0 0
    %1518 = vmatpush1.bf16.msra.mxu0 %v1052
    %1519 = vmatprep.subr.bf16.mxu0 0
    %1520 = vmatpush1.bf16.msra.mxu0 %v1055
    %1521 = vmatprep.subr.bf16.mxu0 0
    %1522 = vmatpush1.bf16.msra.mxu0 %v1058
    %1523 = vmatprep.subr.bf16.mxu0 0
    %1524 = vmatpush1.bf16.msra.mxu0 %v1061
    %1525 = vmatprep.subr.bf16.mxu0 0
    %1526 = vmatpush1.bf16.msra.mxu0 %v1064
    %1527 = vmatprep.subr.bf16.mxu0 0
    %1528 = vmatpush1.bf16.msra.mxu0 %v1067
    %1529 = vmatprep.subr.bf16.mxu0 0
    %1530 = vmatpush1.bf16.msra.mxu0 %v1070
    %1531 = vmatprep.subr.bf16.mxu0 0
    %1532 = vmatpush1.bf16.msra.mxu0 %v1073
    %1533 = vmatprep.subr.bf16.mxu0 0
    %1534 = vmatpush1.bf16.msra.mxu0 %v1076
    %1535 = vmatprep.subr.bf16.mxu0 0
    %1536 = vmatpush1.bf16.msra.mxu0 %v1079
    %1537 = vmatprep.subr.bf16.mxu0 0
    %1538 = vmatpush1.bf16.msra.mxu0 %v1082
    %1539 = vmatprep.subr.bf16.mxu0 0
    %1540 = vmatpush1.bf16.msra.mxu0 %v1085
    %1541 = vmatprep.subr.bf16.mxu0 0
    %1542 = vmatpush1.bf16.msra.mxu0 %v1088
    %1543 = vmatprep.subr.bf16.mxu0 0
    %1544 = vmatpush1.bf16.msra.mxu0 %v1091
    %1545 = vmatprep.subr.bf16.mxu0 0
    %1546 = vmatpush1.bf16.msra.mxu0 %v1094
    %1547 = vmatprep.subr.bf16.mxu0 0
    %1548 = vmatpush1.bf16.msra.mxu0 %v1097
    %1549 = vmatprep.mubr.bf16.mxu0 %v508
    %1550 = vmatmul.mubr.bf16.gmra.mrb[0].mxu0 %v507
    %v1551 = vpop.f32.mrb[0].mxu0
    %v1552 = vadd.f32 %v1455, %v1551
    %v1553 = vpop.f32.mrb[0].mxu0
    %v1554 = vpop.f32.mrb[0].mxu0
    %v1555 = vadd.f32 %v1458, %v1554
    %v1556 = vpop.f32.mrb[0].mxu0
    %1557 = vmatprep.mubr.bf16.mxu0 %v512
    %1558 = vmatmul.mubr.bf16.gmra.mrb[0].mxu0 %v511
    %v1559 = vpop.f32.mrb[0].mxu0
    %v1560 = vadd.f32 %v1463, %v1559
    %v1561 = vpop.f32.mrb[0].mxu0
    %v1562 = vpop.f32.mrb[0].mxu0
    %v1563 = vadd.f32 %v1466, %v1562
    %v1564 = vpop.f32.mrb[0].mxu0
    %1565 = vmatprep.mubr.bf16.mxu0 %v516
    %1566 = vmatmul.mubr.bf16.gmra.mrb[0].mxu0 %v515
    %v1567 = vpop.f32.mrb[0].mxu0
    %v1568 = vadd.f32 %v1471, %v1567
    %v1569 = vpop.f32.mrb[0].mxu0
    %v1570 = vpop.f32.mrb[0].mxu0
    %v1571 = vadd.f32 %v1474, %v1570
    %v1572 = vpop.f32.mrb[0].mxu0
    %1573 = vmatprep.mubr.bf16.mxu0 %v520
    %1574 = vmatmul.mubr.bf16.gmra.mrb[0].mxu0 %v519
    %v1575 = vpop.f32.mrb[0].mxu0
    %v1576 = vadd.f32 %v1479, %v1575
    %v1577 = vpop.f32.mrb[0].mxu0
    %v1578 = vpop.f32.mrb[0].mxu0
    %v1579 = vadd.f32 %v1482, %v1578
    %v1580 = vpop.f32.mrb[0].mxu0
    %1581 = vmatprep.mubr.bf16.mxu0 %v524
    %1582 = vmatmul.mubr.bf16.gmra.mrb[0].mxu0 %v523
    %v1583 = vpop.f32.mrb[0].mxu0
    %v1584 = vadd.f32 %v1487, %v1583
    %v1585 = vpop.f32.mrb[0].mxu0
    %v1586 = vpop.f32.mrb[0].mxu0
    %v1587 = vadd.f32 %v1490, %v1586
    %v1588 = vpop.f32.mrb[0].mxu0
    %1589 = vmatprep.mubr.bf16.mxu0 %v528
    %1590 = vmatmul.mubr.bf16.gmra.mrb[0].mxu0 %v527
    %v1591 = vpop.f32.mrb[0].mxu0
    %v1592 = vadd.f32 %v1495, %v1591
    %v1593 = vpop.f32.mrb[0].mxu0
    %v1594 = vpop.f32.mrb[0].mxu0
    %v1595 = vadd.f32 %v1498, %v1594
    %v1596 = vpop.f32.mrb[0].mxu0
    %1597 = vmatprep.mubr.bf16.mxu0 %v532
    %1598 = vmatmul.mubr.bf16.gmra.mrb[0].mxu0 %v531
    %v1599 = vpop.f32.mrb[0].mxu0
    %v1600 = vadd.f32 %v1503, %v1599
    %v1601 = vpop.f32.mrb[0].mxu0
    %v1602 = vpop.f32.mrb[0].mxu0
    %v1603 = vadd.f32 %v1506, %v1602
    %v1604 = vpop.f32.mrb[0].mxu0
    %1605 = vmatprep.mubr.bf16.mxu0 %v536
    %1606 = vmatmul.mubr.bf16.gmra.mrb[0].mxu0 %v535
    %v1607 = vpop.f32.mrb[0].mxu0
    %v1608 = vadd.f32 %v1511, %v1607
    %v1609 = vpop.f32.mrb[0].mxu0
    %v1610 = vpop.f32.mrb[0].mxu0
    %v1611 = vadd.f32 %v1514, %v1610
    %v1612 = vpop.f32.mrb[0].mxu0
    %1613 = vdwg.mxu0
    %v1614 = vmax.f32 %v1342, 0.0
    %v1615 = vmax.f32 %v1344, 0.0
    %v1616 = vmax.f32 %v1552, 0.0
    %v1617 = vmax.f32 %v1346, 0.0
    %v1618 = vmax.f32 %v1348, 0.0
    %v1619 = vmax.f32 %v1555, 0.0
    %v1620 = vmax.f32 %v1352, 0.0
    %v1621 = vmax.f32 %v1354, 0.0
    %v1622 = vmax.f32 %v1560, 0.0
    %v1623 = vmax.f32 %v1356, 0.0
    %v1624 = vmax.f32 %v1358, 0.0
    %v1625 = vmax.f32 %v1563, 0.0
    %v1626 = vmax.f32 %v1362, 0.0
    %v1627 = vmax.f32 %v1364, 0.0
    %v1628 = vmax.f32 %v1568, 0.0
    %v1629 = vmax.f32 %v1366, 0.0
    %v1630 = vmax.f32 %v1368, 0.0
    %v1631 = vmax.f32 %v1571, 0.0
    %v1632 = vmax.f32 %v1372, 0.0
    %v1633 = vmax.f32 %v1374, 0.0
    %v1634 = vmax.f32 %v1576, 0.0
    %v1635 = vmax.f32 %v1376, 0.0
    %v1636 = vmax.f32 %v1378, 0.0
    %v1637 = vmax.f32 %v1579, 0.0
    %v1638 = vmax.f32 %v1382, 0.0
    %v1639 = vmax.f32 %v1384, 0.0
    %v1640 = vmax.f32 %v1584, 0.0
    %v1641 = vmax.f32 %v1386, 0.0
    %v1642 = vmax.f32 %v1388, 0.0
    %v1643 = vmax.f32 %v1587, 0.0
    %v1644 = vmax.f32 %v1392, 0.0
    %v1645 = vmax.f32 %v1394, 0.0
    %v1646 = vmax.f32 %v1592, 0.0
    %v1647 = vmax.f32 %v1396, 0.0
    %v1648 = vmax.f32 %v1398, 0.0
    %v1649 = vmax.f32 %v1595, 0.0
    %v1650 = vmax.f32 %v1402, 0.0
    %v1651 = vmax.f32 %v1404, 0.0
    %v1652 = vmax.f32 %v1600, 0.0
    %v1653 = vmax.f32 %v1406, 0.0
    %v1654 = vmax.f32 %v1408, 0.0
    %v1655 = vmax.f32 %v1603, 0.0
    %v1656 = vmax.f32 %v1412, 0.0
    %v1657 = vmax.f32 %v1414, 0.0
    %v1658 = vmax.f32 %v1608, 0.0
    %v1659 = vmax.f32 %v1416, 0.0
    %v1660 = vmax.f32 %v1418, 0.0
    %v1661 = vmax.f32 %v1611, 0.0
    %v1662 = vpack.c.bf16 %v1617, %v1614
    %v1663 = vpack.c.bf16 %v1618, %v1615
    %v1664 = vpack.c.bf16 %v1619, %v1616
    %v1665 = vpack.c.bf16 %v1623, %v1620
    %v1666 = vpack.c.bf16 %v1624, %v1621
    %v1667 = vpack.c.bf16 %v1625, %v1622
    %v1668 = vpack.c.bf16 %v1629, %v1626
    %v1669 = vpack.c.bf16 %v1630, %v1627
    %v1670 = vpack.c.bf16 %v1631, %v1628
    %v1671 = vpack.c.bf16 %v1635, %v1632
    %v1672 = vpack.c.bf16 %v1636, %v1633
    %v1673 = vpack.c.bf16 %v1637, %v1634
    %v1674 = vpack.c.bf16 %v1641, %v1638
    %v1675 = vpack.c.bf16 %v1642, %v1639
    %v1676 = vpack.c.bf16 %v1643, %v1640
    %v1677 = vpack.c.bf16 %v1647, %v1644
    %v1678 = vpack.c.bf16 %v1648, %v1645
    %v1679 = vpack.c.bf16 %v1649, %v1646
    %v1680 = vpack.c.bf16 %v1653, %v1650
    %v1681 = vpack.c.bf16 %v1654, %v1651
    %v1682 = vpack.c.bf16 %v1655, %v1652
    %v1683 = vpack.c.bf16 %v1659, %v1656
    %v1684 = vpack.c.bf16 %v1660, %v1657
    %v1685 = vpack.c.bf16 %v1661, %v1658
    %v1686 = vld [vmem:[#allocation6] sm:$0xf]
    %v1687 = vld [vmem:[#allocation6 + $0x4] sm:$0xf]
    %v1688 = vld [vmem:[#allocation6 + $0x8] sm:$0xf]
    %v1689 = vld [vmem:[#allocation6 + $0xc] sm:$0xf]
    %v1690 = vld [vmem:[#allocation6 + $0x10] sm:$0xf]
    %v1691 = vld [vmem:[#allocation6 + $0x14] sm:$0xf]
    %v1692 = vld [vmem:[#allocation6 + $0x18] sm:$0xf]
    %v1693 = vld [vmem:[#allocation6 + $0x1c] sm:$0xf]
    %v1694 = vld [vmem:[#allocation6 + $0x20] sm:$0xf]
    %v1695 = vld [vmem:[#allocation6 + $0x24] sm:$0xf]
    %v1696 = vld [vmem:[#allocation6 + $0x28] sm:$0xf]
    %v1697 = vld [vmem:[#allocation6 + $0x2c] sm:$0xf]
    %v1698 = vld [vmem:[#allocation6 + $0x30] sm:$0xf]
    %v1699 = vld [vmem:[#allocation6 + $0x34] sm:$0xf]
    %v1700 = vld [vmem:[#allocation6 + $0x38] sm:$0xf]
    %v1701 = vld [vmem:[#allocation6 + $0x3c] sm:$0xf]
    %v1702 = vld [vmem:[#allocation6 + $0x40] sm:$0xf]
    %v1703 = vld [vmem:[#allocation6 + $0x44] sm:$0xf]
    %v1704 = vld [vmem:[#allocation6 + $0x48] sm:$0xf]
    %v1705 = vld [vmem:[#allocation6 + $0x4c] sm:$0xf]
    %v1706 = vld [vmem:[#allocation6 + $0x50] sm:$0xf]
    %v1707 = vld [vmem:[#allocation6 + $0x54] sm:$0xf]
    %v1708 = vld [vmem:[#allocation6 + $0x58] sm:$0xf]
    %v1709 = vld [vmem:[#allocation6 + $0x5c] sm:$0xf]
    %v1710 = vld [vmem:[#allocation6 + $0x60] sm:$0xf]
    %v1711 = vld [vmem:[#allocation6 + $0x64] sm:$0xf]
    %v1712 = vld [vmem:[#allocation6 + $0x68] sm:$0xf]
    %v1713 = vld [vmem:[#allocation6 + $0x6c] sm:$0xf]
    %v1714 = vld [vmem:[#allocation6 + $0x70] sm:$0xf]
    %v1715 = vld [vmem:[#allocation6 + $0x74] sm:$0xf]
    %v1716 = vld [vmem:[#allocation6 + $0x78] sm:$0xf]
    %v1717 = vld [vmem:[#allocation6 + $0x7c] sm:$0xf]
    %v1718 = vld [vmem:[#allocation6 + $0x80] sm:$0xf]
    %v1719 = vld [vmem:[#allocation6 + $0x84] sm:$0xf]
    %v1720 = vld [vmem:[#allocation6 + $0x88] sm:$0xf]
    %v1721 = vld [vmem:[#allocation6 + $0x8c] sm:$0xf]
    %v1722 = vld [vmem:[#allocation6 + $0x90] sm:$0xf]
    %v1723 = vld [vmem:[#allocation6 + $0x94] sm:$0xf]
    %v1724 = vld [vmem:[#allocation6 + $0x98] sm:$0xf]
    %v1725 = vld [vmem:[#allocation6 + $0x9c] sm:$0xf]
    %v1726 = vld [vmem:[#allocation6 + $0xa0] sm:$0xf]
    %v1727 = vld [vmem:[#allocation6 + $0xa4] sm:$0xf]
    %v1728 = vld [vmem:[#allocation6 + $0xa8] sm:$0xf]
    %v1729 = vld [vmem:[#allocation6 + $0xac] sm:$0xf]
    %v1730 = vld [vmem:[#allocation6 + $0xb0] sm:$0xf]
    %v1731 = vld [vmem:[#allocation6 + $0xb4] sm:$0xf]
    %v1732 = vld [vmem:[#allocation6 + $0xb8] sm:$0xf]
    %v1733 = vld [vmem:[#allocation6 + $0xbc] sm:$0xf]
    %v1734 = vld [vmem:[%s6] sm:$0x1]
    %v1736 = vlaneseq
    %v1737 = vshrl.u32 %v1736, 7
    %v1738 = vsub.s32 0, %v1737
    %v1739 = vrot.slane %v1734, %v1738
    %v1789 = vunpack.c.l.b16 %v1686
    %v1790 = vunpack.c.l.b16 %v1687
    %v1791 = vunpack.c.l.b16 %v1688
    %v1792 = vunpack.c.l.b16 %v1689
    %v1793 = vunpack.c.l.b16 %v1690
    %v1794 = vunpack.c.l.b16 %v1691
    %v1795 = vunpack.c.l.b16 %v1692
    %v1796 = vunpack.c.l.b16 %v1693
    %v1797 = vunpack.c.l.b16 %v1694
    %v1798 = vunpack.c.l.b16 %v1695
    %v1799 = vunpack.c.l.b16 %v1696
    %v1800 = vunpack.c.l.b16 %v1697
    %v1801 = vunpack.c.l.b16 %v1698
    %v1802 = vunpack.c.l.b16 %v1699
    %v1803 = vunpack.c.l.b16 %v1700
    %v1804 = vunpack.c.l.b16 %v1701
    %v1805 = vunpack.c.l.b16 %v1702
    %v1806 = vunpack.c.l.b16 %v1703
    %v1807 = vunpack.c.l.b16 %v1704
    %v1808 = vunpack.c.l.b16 %v1705
    %v1809 = vunpack.c.l.b16 %v1706
    %v1810 = vunpack.c.l.b16 %v1707
    %v1811 = vunpack.c.l.b16 %v1708
    %v1812 = vunpack.c.l.b16 %v1709
    %v1813 = vunpack.c.l.b16 %v1710
    %v1814 = vunpack.c.l.b16 %v1711
    %v1815 = vunpack.c.l.b16 %v1712
    %v1816 = vunpack.c.l.b16 %v1713
    %v1817 = vunpack.c.l.b16 %v1714
    %v1818 = vunpack.c.l.b16 %v1715
    %v1819 = vunpack.c.l.b16 %v1716
    %v1820 = vunpack.c.l.b16 %v1717
    %v1821 = vunpack.c.l.b16 %v1718
    %v1822 = vunpack.c.l.b16 %v1719
    %v1823 = vunpack.c.l.b16 %v1720
    %v1824 = vunpack.c.l.b16 %v1721
    %v1825 = vunpack.c.l.b16 %v1722
    %v1826 = vunpack.c.l.b16 %v1723
    %v1827 = vunpack.c.l.b16 %v1724
    %v1828 = vunpack.c.l.b16 %v1725
    %v1829 = vunpack.c.l.b16 %v1726
    %v1830 = vunpack.c.l.b16 %v1727
    %v1831 = vunpack.c.l.b16 %v1728
    %v1832 = vunpack.c.l.b16 %v1729
    %v1833 = vunpack.c.l.b16 %v1730
    %v1834 = vunpack.c.l.b16 %v1731
    %v1835 = vunpack.c.l.b16 %v1732
    %v1836 = vunpack.c.l.b16 %v1733
    %v1837 = vpack.c.b16 %v1790, %v1789
    %v1838 = vpack.c.b16 %v1792, %v1791
    %v1839 = vpack.c.b16 %v1794, %v1793
    %v1840 = vpack.c.b16 %v1796, %v1795
    %v1841 = vpack.c.b16 %v1798, %v1797
    %v1842 = vpack.c.b16 %v1800, %v1799
    %v1843 = vpack.c.b16 %v1802, %v1801
    %v1844 = vpack.c.b16 %v1804, %v1803
    %v1845 = vpack.c.b16 %v1806, %v1805
    %v1846 = vpack.c.b16 %v1808, %v1807
    %v1847 = vpack.c.b16 %v1810, %v1809
    %v1848 = vpack.c.b16 %v1812, %v1811
    %v1849 = vpack.c.b16 %v1814, %v1813
    %v1850 = vpack.c.b16 %v1816, %v1815
    %v1851 = vpack.c.b16 %v1818, %v1817
    %v1852 = vpack.c.b16 %v1820, %v1819
    %v1853 = vpack.c.b16 %v1822, %v1821
    %v1854 = vpack.c.b16 %v1824, %v1823
    %v1855 = vpack.c.b16 %v1826, %v1825
    %v1856 = vpack.c.b16 %v1828, %v1827
    %v1857 = vpack.c.b16 %v1830, %v1829
    %v1858 = vpack.c.b16 %v1832, %v1831
    %v1859 = vpack.c.b16 %v1834, %v1833
    %v1860 = vpack.c.b16 %v1836, %v1835
    %1885 = vmatprep.subr.bf16.mxu0 0
    %1886 = vmatpush1.bf16.msra.mxu0 %v1837
    %1887 = vmatprep.subr.bf16.mxu0 0
    %1888 = vmatpush1.bf16.msra.mxu0 %v1838
    %1889 = vmatprep.subr.bf16.mxu0 0
    %1890 = vmatpush1.bf16.msra.mxu0 %v1839
    %1891 = vmatprep.subr.bf16.mxu0 0
    %1892 = vmatpush1.bf16.msra.mxu0 %v1840
    %1893 = vmatprep.subr.bf16.mxu0 0
    %1894 = vmatpush1.bf16.msra.mxu0 %v1841
    %1895 = vmatprep.subr.bf16.mxu0 0
    %1896 = vmatpush1.bf16.msra.mxu0 %v1842
    %1897 = vmatprep.subr.bf16.mxu0 0
    %1898 = vmatpush1.bf16.msra.mxu0 %v1843
    %1899 = vmatprep.subr.bf16.mxu0 0
    %1900 = vmatpush1.bf16.msra.mxu0 %v1844
    %1901 = vmatprep.subr.bf16.mxu0 0
    %1902 = vmatpush1.bf16.msra.mxu0 %v1845
    %1903 = vmatprep.subr.bf16.mxu0 0
    %1904 = vmatpush1.bf16.msra.mxu0 %v1846
    %1905 = vmatprep.subr.bf16.mxu0 0
    %1906 = vmatpush1.bf16.msra.mxu0 %v1847
    %1907 = vmatprep.subr.bf16.mxu0 0
    %1908 = vmatpush1.bf16.msra.mxu0 %v1848
    %1909 = vmatprep.subr.bf16.mxu0 0
    %1910 = vmatpush1.bf16.msra.mxu0 %v1849
    %1911 = vmatprep.subr.bf16.mxu0 0
    %1912 = vmatpush1.bf16.msra.mxu0 %v1850
    %1913 = vmatprep.subr.bf16.mxu0 0
    %1914 = vmatpush1.bf16.msra.mxu0 %v1851
    %1915 = vmatprep.subr.bf16.mxu0 0
    %1916 = vmatpush1.bf16.msra.mxu0 %v1852
    %1917 = vmatprep.mubr.bf16.mxu0 %v1663
    %1918 = vmatmul.mubr.bf16.gmra.mrb[0].mxu0 %v1662
    %v1919 = vpop.f32.mrb[0].mxu0
    %v1920 = vadd.f32 %v1739, %v1919
    %v1921 = vpop.f32.mrb[0].mxu0
    %v1922 = vpop.f32.mrb[0].mxu0
    %v1923 = vadd.f32 %v1739, %v1922
    %v1924 = vpop.f32.mrb[0].mxu0
    %1925 = vmatprep.mubr.bf16.mxu0 %v1666
    %1926 = vmatmul.mubr.bf16.gmra.mrb[0].mxu0 %v1665
    %v1927 = vpop.f32.mrb[0].mxu0
    %v1928 = vadd.f32 %v1739, %v1927
    %v1929 = vpop.f32.mrb[0].mxu0
    %v1930 = vpop.f32.mrb[0].mxu0
    %v1931 = vadd.f32 %v1739, %v1930
    %v1932 = vpop.f32.mrb[0].mxu0
    %1933 = vmatprep.mubr.bf16.mxu0 %v1669
    %1934 = vmatmul.mubr.bf16.gmra.mrb[0].mxu0 %v1668
    %v1935 = vpop.f32.mrb[0].mxu0
    %v1936 = vadd.f32 %v1739, %v1935
    %v1937 = vpop.f32.mrb[0].mxu0
    %v1938 = vpop.f32.mrb[0].mxu0
    %v1939 = vadd.f32 %v1739, %v1938
    %v1940 = vpop.f32.mrb[0].mxu0
    %1941 = vmatprep.mubr.bf16.mxu0 %v1672
    %1942 = vmatmul.mubr.bf16.gmra.mrb[0].mxu0 %v1671
    %v1943 = vpop.f32.mrb[0].mxu0
    %v1944 = vadd.f32 %v1739, %v1943
    %v1945 = vpop.f32.mrb[0].mxu0
    %v1946 = vpop.f32.mrb[0].mxu0
    %v1947 = vadd.f32 %v1739, %v1946
    %v1948 = vpop.f32.mrb[0].mxu0
    %1949 = vmatprep.mubr.bf16.mxu0 %v1675
    %1950 = vmatmul.mubr.bf16.gmra.mrb[0].mxu0 %v1674
    %v1951 = vpop.f32.mrb[0].mxu0
    %v1952 = vadd.f32 %v1739, %v1951
    %v1953 = vpop.f32.mrb[0].mxu0
    %v1954 = vpop.f32.mrb[0].mxu0
    %v1955 = vadd.f32 %v1739, %v1954
    %v1956 = vpop.f32.mrb[0].mxu0
    %1957 = vmatprep.mubr.bf16.mxu0 %v1678
    %1958 = vmatmul.mubr.bf16.gmra.mrb[0].mxu0 %v1677
    %v1959 = vpop.f32.mrb[0].mxu0
    %v1960 = vadd.f32 %v1739, %v1959
    %v1961 = vpop.f32.mrb[0].mxu0
    %v1962 = vpop.f32.mrb[0].mxu0
    %v1963 = vadd.f32 %v1739, %v1962
    %v1964 = vpop.f32.mrb[0].mxu0
    %1965 = vmatprep.mubr.bf16.mxu0 %v1681
    %1966 = vmatmul.mubr.bf16.gmra.mrb[0].mxu0 %v1680
    %v1967 = vpop.f32.mrb[0].mxu0
    %v1968 = vadd.f32 %v1739, %v1967
    %v1969 = vpop.f32.mrb[0].mxu0
    %v1970 = vpop.f32.mrb[0].mxu0
    %v1971 = vadd.f32 %v1739, %v1970
    %v1972 = vpop.f32.mrb[0].mxu0
    %1973 = vmatprep.mubr.bf16.mxu0 %v1684
    %1974 = vmatmul.mubr.bf16.gmra.mrb[0].mxu0 %v1683
    %v1975 = vpop.f32.mrb[0].mxu0
    %v1976 = vadd.f32 %v1739, %v1975
    %v1977 = vpop.f32.mrb[0].mxu0
    %v1978 = vpop.f32.mrb[0].mxu0
    %v1979 = vadd.f32 %v1739, %v1978
    %v1980 = vpop.f32.mrb[0].mxu0
    %1981 = vdwg.mxu0
    %1982 = vmatprep.subr.bf16.mxu0 0
    %1983 = vmatpush1.bf16.msra.mxu0 %v1853
    %1984 = vmatprep.subr.bf16.mxu0 0
    %1985 = vmatpush1.bf16.msra.mxu0 %v1854
    %1986 = vmatprep.subr.bf16.mxu0 0
    %1987 = vmatpush1.bf16.msra.mxu0 %v1855
    %1988 = vmatprep.subr.bf16.mxu0 0
    %1989 = vmatpush1.bf16.msra.mxu0 %v1856
    %1990 = vmatprep.subr.bf16.mxu0 0
    %1991 = vmatpush1.bf16.msra.mxu0 %v1857
    %1992 = vmatprep.subr.bf16.mxu0 0
    %1993 = vmatpush1.bf16.msra.mxu0 %v1858
    %1994 = vmatprep.subr.bf16.mxu0 0
    %1995 = vmatpush1.bf16.msra.mxu0 %v1859
    %1996 = vmatprep.subr.bf16.mxu0 0
    %1997 = vmatpush1.bf16.msra.mxu0 %v1860
    %1998 = vmatprep.subr.bf16.mxu0 0
    %1999 = vmatpush1.bf16.msra.mxu0 0
    %2000 = vmatprep.subr.bf16.mxu0 0
    %2001 = vmatpush1.bf16.msra.mxu0 0
    %2002 = vmatprep.subr.bf16.mxu0 0
    %2003 = vmatpush1.bf16.msra.mxu0 0
    %2004 = vmatprep.subr.bf16.mxu0 0
    %2005 = vmatpush1.bf16.msra.mxu0 0
    %2006 = vmatprep.subr.bf16.mxu0 0
    %2007 = vmatpush1.bf16.msra.mxu0 0
    %2008 = vmatprep.subr.bf16.mxu0 0
    %2009 = vmatpush1.bf16.msra.mxu0 0
    %2010 = vmatprep.subr.bf16.mxu0 0
    %2011 = vmatpush1.bf16.msra.mxu0 0
    %2012 = vmatprep.subr.bf16.mxu0 0
    %2013 = vmatpush1.bf16.msra.mxu0 0
    %2014 = vmatprep.mubr.bf16.mxu0 0
    %2015 = vmatmul.mubr.bf16.gmra.mrb[0].mxu0 %v1664
    %v2016 = vpop.f32.mrb[0].mxu0
    %v2017 = vadd.f32 %v1920, %v2016
    %v2018 = vpop.f32.mrb[0].mxu0
    %v2019 = vpop.f32.mrb[0].mxu0
    %v2020 = vadd.f32 %v1923, %v2019
    %v2021 = vpop.f32.mrb[0].mxu0
    %2022 = vmatprep.mubr.bf16.mxu0 0
    %2023 = vmatmul.mubr.bf16.gmra.mrb[0].mxu0 %v1667
    %v2024 = vpop.f32.mrb[0].mxu0
    %v2025 = vadd.f32 %v1928, %v2024
    %v2026 = vpop.f32.mrb[0].mxu0
    %v2027 = vpop.f32.mrb[0].mxu0
    %v2028 = vadd.f32 %v1931, %v2027
    %v2029 = vpop.f32.mrb[0].mxu0
    %2030 = vmatprep.mubr.bf16.mxu0 0
    %2031 = vmatmul.mubr.bf16.gmra.mrb[0].mxu0 %v1670
    %v2032 = vpop.f32.mrb[0].mxu0
    %v2033 = vadd.f32 %v1936, %v2032
    %v2034 = vpop.f32.mrb[0].mxu0
    %v2035 = vpop.f32.mrb[0].mxu0
    %v2036 = vadd.f32 %v1939, %v2035
    %v2037 = vpop.f32.mrb[0].mxu0
    %2038 = vmatprep.mubr.bf16.mxu0 0
    %2039 = vmatmul.mubr.bf16.gmra.mrb[0].mxu0 %v1673
    %v2040 = vpop.f32.mrb[0].mxu0
    %v2041 = vadd.f32 %v1944, %v2040
    %v2042 = vpop.f32.mrb[0].mxu0
    %v2043 = vpop.f32.mrb[0].mxu0
    %v2044 = vadd.f32 %v1947, %v2043
    %v2045 = vpop.f32.mrb[0].mxu0
    %2046 = vmatprep.mubr.bf16.mxu0 0
    %2047 = vmatmul.mubr.bf16.gmra.mrb[0].mxu0 %v1676
    %v2048 = vpop.f32.mrb[0].mxu0
    %v2049 = vadd.f32 %v1952, %v2048
    %v2050 = vpop.f32.mrb[0].mxu0
    %v2051 = vpop.f32.mrb[0].mxu0
    %v2052 = vadd.f32 %v1955, %v2051
    %v2053 = vpop.f32.mrb[0].mxu0
    %2054 = vmatprep.mubr.bf16.mxu0 0
    %2055 = vmatmul.mubr.bf16.gmra.mrb[0].mxu0 %v1679
    %v2056 = vpop.f32.mrb[0].mxu0
    %v2057 = vadd.f32 %v1960, %v2056
    %v2058 = vpop.f32.mrb[0].mxu0
    %v2059 = vpop.f32.mrb[0].mxu0
    %v2060 = vadd.f32 %v1963, %v2059
    %v2061 = vpop.f32.mrb[0].mxu0
    %2062 = vmatprep.mubr.bf16.mxu0 0
    %2063 = vmatmul.mubr.bf16.gmra.mrb[0].mxu0 %v1682
    %v2064 = vpop.f32.mrb[0].mxu0
    %v2065 = vadd.f32 %v1968, %v2064
    %v2066 = vpop.f32.mrb[0].mxu0
    %v2067 = vpop.f32.mrb[0].mxu0
    %v2068 = vadd.f32 %v1971, %v2067
    %v2069 = vpop.f32.mrb[0].mxu0
    %2070 = vmatprep.mubr.bf16.mxu0 0
    %2071 = vmatmul.mubr.bf16.gmra.mrb[0].mxu0 %v1685
    %v2072 = vpop.f32.mrb[0].mxu0
    %v2073 = vadd.f32 %v1976, %v2072
    %v2074 = vpop.f32.mrb[0].mxu0
    %v2075 = vpop.f32.mrb[0].mxu0
    %v2076 = vadd.f32 %v1979, %v2075
    %v2077 = vpop.f32.mrb[0].mxu0
    %2078 = vdwg.mxu0
    %v2079 = vmax.f32 %v2017, 0.0
    %v2080 = vmax.f32 %v2020, 0.0
    %v2081 = vmax.f32 %v2025, 0.0
    %v2082 = vmax.f32 %v2028, 0.0
    %v2083 = vmax.f32 %v2033, 0.0
    %v2084 = vmax.f32 %v2036, 0.0
    %v2085 = vmax.f32 %v2041, 0.0
    %v2086 = vmax.f32 %v2044, 0.0
    %v2087 = vmax.f32 %v2049, 0.0
    %v2088 = vmax.f32 %v2052, 0.0
    %v2089 = vmax.f32 %v2057, 0.0
    %v2090 = vmax.f32 %v2060, 0.0
    %v2091 = vmax.f32 %v2065, 0.0
    %v2092 = vmax.f32 %v2068, 0.0
    %v2093 = vmax.f32 %v2073, 0.0
    %v2094 = vmax.f32 %v2076, 0.0
    %v2095 = vld [vmem:[%s7] sm:$0x1]
    %v2096 = vpack.c.bf16 %v2080, %v2079
    %v2097 = vpack.c.bf16 %v2082, %v2081
    %v2098 = vpack.c.bf16 %v2084, %v2083
    %v2099 = vpack.c.bf16 %v2086, %v2085
    %v2100 = vpack.c.bf16 %v2088, %v2087
    %v2101 = vpack.c.bf16 %v2090, %v2089
    %v2102 = vpack.c.bf16 %v2092, %v2091
    %v2103 = vpack.c.bf16 %v2094, %v2093
    %v2104 = vld [vmem:[#allocation2] sm:$0x1]
    %2106 = vset.pattern.permute.xlu0 0
    %2107 = vperm.xlu0 %2106, %v2104
    %v2108 = vpop.permute.xlu0 %2107
    %v2110 = vlaneseq
    %v2111 = vshrl.u32 %v2110, 7
    %v2112 = vsub.s32 0, %v2111
    %v2113 = vrot.slane %v2108, %v2112
    %2114 = vmatprep.subr.bf16.mxu0 0
    %2115 = vmatpush1.bf16.xpose.msra.mxu0 %v2096
    %2116 = vmatprep.subr.bf16.mxu0 0
    %2117 = vmatpush1.bf16.xpose.msra.mxu0 %v2097
    %2118 = vmatprep.subr.bf16.mxu0 0
    %2119 = vmatpush1.bf16.xpose.msra.mxu0 %v2098
    %2120 = vmatprep.subr.bf16.mxu0 0
    %2121 = vmatpush1.bf16.xpose.msra.mxu0 %v2099
    %2122 = vmatprep.subr.bf16.mxu0 0
    %2123 = vmatpush1.bf16.xpose.msra.mxu0 %v2100
    %2124 = vmatprep.subr.bf16.mxu0 0
    %2125 = vmatpush1.bf16.xpose.msra.mxu0 %v2101
    %2126 = vmatprep.subr.bf16.mxu0 0
    %2127 = vmatpush1.bf16.xpose.msra.mxu0 %v2102
    %2128 = vmatprep.subr.bf16.mxu0 0
    %2129 = vmatpush1.bf16.xpose.msra.mxu0 %v2103
    %2130 = vmatprep.subr.bf16.mxu0 0
    %2131 = vmatpush1.bf16.xpose.msra.mxu0 0
    %2132 = vmatprep.subr.bf16.mxu0 0
    %2133 = vmatpush1.bf16.xpose.msra.mxu0 0
    %2134 = vmatprep.subr.bf16.mxu0 0
    %2135 = vmatpush1.bf16.xpose.msra.mxu0 0
    %2136 = vmatprep.subr.bf16.mxu0 0
    %2137 = vmatpush1.bf16.xpose.msra.mxu0 0
    %2138 = vmatprep.subr.bf16.mxu0 0
    %2139 = vmatpush1.bf16.xpose.msra.mxu0 0
    %2140 = vmatprep.subr.bf16.mxu0 0
    %2141 = vmatpush1.bf16.xpose.msra.mxu0 0
    %2142 = vmatprep.subr.bf16.mxu0 0
    %2143 = vmatpush1.bf16.xpose.msra.mxu0 0
    %2144 = vmatprep.subr.bf16.mxu0 0
    %2145 = vmatpush1.bf16.xpose.msra.mxu0 0
    %2146 = vmatprep.mubr.bf16.mxu0 0
    %2147 = vmatmul.mubr.bf16.gmra.mrb[0].mxu0 %v2095
    %v2148 = vpop.f32.mrb[0].mxu0
    %v2149 = vadd.f32 %v2113, %v2148
    %v2150 = vpop.f32.mrb[0].mxu0
    %v2151 = vpop.f32.mrb[0].mxu0
    %v2152 = vpop.f32.mrb[0].mxu0
    %2153 = vdwg.mxu0
    %2154 = vst [vmem:[#allocation8] sm:$0x1] %v2149
    // Predicated region
    $region46: #{tpu_custom_call.1} parent=1 // pred_check
      _
    $region47: #{tpu_custom_call.1} parent=1 // pred_check_branch
      %2156 = sbr.rel (0) target = $region49
    $region48: #{tpu_custom_call.1} parent=1 // pred_region
      %s2158 = ssub.s32 16, 16
      %2159 = vsyncadd [#allocation5], %s2158
      %s2161 = sshll.u32 [#allocation8], 4
      %s2162 = int_to_ptr.vmem [resolvable:$true] %s2161
      %2164 = dma.vmem_to_hbm [thread:$0]  %s2162, 16, %s9, [#allocation5]
    $region49: #{tpu_custom_call.1} parent=1 // pred_fallthru
      _
    // Predicated region
    $region50: #{tpu_custom_call.1} parent=1 // pred_check
      _
    $region51: #{tpu_custom_call.1} parent=1 // pred_check_branch
      %2166 = sbr.rel (0) target = $region53
    $region52: #{tpu_custom_call.1} parent=1 // pred_region
      %2167 = dma.done [#allocation5], 16
    $region53: #{tpu_custom_call.1} parent=1 // pred_fallthru
      _
    %2168 = vsyncpa [#allocation4], 1
    %2169 = vsyncpa [#allocation7], 1
    %2170 = vsyncpa [#allocation5], 1

</llo_original>
